<compile_context>
chip_gen: v7x
topology: tpu7x:2x2x1
jax: 0.10.0
libtpu: 0.0.40
codegen_flags: <defaults>
</compile_context>

<pallas_src>
import functools

import jax
import jax.numpy as jnp
from jax.experimental import pallas as pl
from jax.experimental.pallas import tpu as pltpu


def _round_up(x, m):
    return (x + m - 1) // m * m


def _fused_block_kernel(x_ref, w1_ref, w2_ref, o_ref, xpad, midpad, lhs, *, H, W, C):
    # x_ref : (1, C, S) f32, S = H*W (lane dim = S: lane-dense)
    # w*_ref: (C, 9C) bf16, resident across grid steps (constant index_map)
    # o_ref : (1, C, S) f32
    # xpad, midpad: (C, Rp) bf16 flat halo-padded scratches with row pitch Wp = W + 1
    #               (image pixel (h, w) lives at flat column (h+1)*Wp + (w+1); the shared
    #                column (h+2)*Wp is the zero halo between rows h and h+1)
    # lhs   : (9C, Mp) bf16 im2col scratch, Mp = H*Wp - 1 flat output positions
    bf16 = jnp.bfloat16
    Wp = W + 1
    Mp = H * Wp - 1
    Rp = xpad.shape[1]

    zero_col = jnp.zeros((C, 1), bf16)                 # hoisted (broadcasts are not CSE'd)
    zero_pre = jnp.zeros((C, W + 2), bf16)
    zero_suf = jnp.zeros((C, Rp - (H + 1) * Wp), bf16)

    # ---- build the halo-padded bf16 pitch-(W+1) copy of x (only halo strips zeroed) ----
    xpad[:, 0:W + 2] = zero_pre                        # top halo row + left halo of row 0
    xpad[:, (H + 1) * Wp:Rp] = zero_suf                # bottom halo row (+ alignment tail)
    for h in range(H):                                 # small H; tile H for large images
        row = x_ref[0, :, h * W:(h + 1) * W].astype(bf16)
        xpad[:, (h + 1) * Wp + 1:(h + 1) * Wp + 1 + W] = row
        xpad[:, (h + 2) * Wp:(h + 2) * Wp + 1] = zero_col   # shared halo column

    def conv3x3(src, w2d):
        # im2col: stack the 9 tap-shifted slabs along sublanes -> one full-depth matmul.
        for kh in range(3):
            for kw in range(3):
                t = kh * 3 + kw
                s = kh * Wp + kw
                lhs[t * C:(t + 1) * C, :] = src[:, s:s + Mp]
        return jnp.dot(w2d, lhs[...], preferred_element_type=jnp.float32)   # (C, Mp) f32

    w1 = w1_ref[...]
    w2 = w2_ref[...]

    # ---- conv1 + ReLU: result never leaves VMEM, rewritten into padded flat layout ----
    mid = jnp.maximum(conv3x3(xpad, w1), 0.0).astype(bf16)        # (C, Mp)
    midpad[:, 0:W + 2] = zero_pre
    midpad[:, (H + 1) * Wp:Rp] = zero_suf
    midpad[:, W + 2:W + 2 + Mp] = mid                             # one bulk lane-dense store
    for h in range(H - 1):                                        # re-zero shared halo cols
        midpad[:, (h + 2) * Wp:(h + 2) * Wp + 1] = zero_col

    # ---- conv2 + identity residual (f32, straight from the input block) + ReLU ----
    acc2 = conv3x3(midpad, w2)                                    # (C, Mp) f32
    for h in range(H):
        out_row = acc2[:, h * Wp:h * Wp + W] + x_ref[0, :, h * W:(h + 1) * W]
        o_ref[0, :, h * W:(h + 1) * W] = jnp.maximum(out_row, 0.0)


def basic_encode_block(x_nchw, w1_oihw, w2_oihw):
    """Pallas implementation of BasicEncodeBlock.forward (stride=1, no downsample)."""
    N, Cin, H, W = x_nchw.shape
    Cout = w1_oihw.shape[0]
    assert Cin == Cout, "identity residual requires inplanes == planes"
    C = Cin
    S = H * W
    Wp = W + 1
    Mp = H * Wp - 1
    Rp = _round_up((H + 2) * Wp + 1, 128)

    # No transposes of the activation: (N, C, H, W) -> (N, C, H*W) is a free reshape.
    x = x_nchw.reshape(N, C, S).astype(jnp.float32)
    # OIHW -> (Cout, 9*Cin) with column index (kh*3 + kw)*Cin + ci matching the im2col LHS.
    w1 = jnp.transpose(w1_oihw, (0, 2, 3, 1)).reshape(C, 9 * C).astype(jnp.bfloat16)
    w2 = jnp.transpose(w2_oihw, (0, 2, 3, 1)).reshape(C, 9 * C).astype(jnp.bfloat16)

    kernel = functools.partial(_fused_block_kernel, H=H, W=W, C=C)

    flops = 2 * (2 * 9 * N * H * W * C * C)            # two 3x3 convs
    bytes_accessed = 2 * N * S * C * 4 + 2 * 9 * C * C * 2

    out = pl.pallas_call(
        kernel,
        out_shape=jax.ShapeDtypeStruct((N, C, S), jnp.float32),
        grid=(N,),
        in_specs=[
            pl.BlockSpec((1, C, S), lambda n: (n, 0, 0)),
            pl.BlockSpec((C, 9 * C), lambda n: (0, 0)),          # resident weights
            pl.BlockSpec((C, 9 * C), lambda n: (0, 0)),          # resident weights
        ],
        out_specs=pl.BlockSpec((1, C, S), lambda n: (n, 0, 0)),
        scratch_shapes=[
            pltpu.VMEM((C, Rp), jnp.bfloat16),                   # padded x
            pltpu.VMEM((C, Rp), jnp.bfloat16),                   # padded conv1 output
            pltpu.VMEM((9 * C, Mp), jnp.bfloat16),               # shared im2col LHS
        ],
        compiler_params=pltpu.CompilerParams(
            dimension_semantics=("parallel",),
            vmem_limit_bytes=64 * 1024 * 1024),
        cost_estimate=pl.CostEstimate(
            flops=flops, transcendentals=0, bytes_accessed=bytes_accessed),
    )(x, w1, w2)

    return out.reshape(N, C, H, W)                     # free reshape back to NCHW


def reference_forward(x, w1, w2):
    """Pure-JAX reference (NCHW, OIHW), mirrors the PyTorch module exactly."""
    dn = ("NCHW", "OIHW", "NCHW")
    conv = functools.partial(
        jax.lax.conv_general_dilated,
        window_strides=(1, 1),
        padding=((1, 1), (1, 1)),
        dimension_numbers=dn,
        precision=jax.lax.Precision.HIGHEST,
    )
    out = jnp.maximum(conv(x, w1), 0.0)
    out = conv(out, w2) + x
    return jnp.maximum(out, 0.0)


if __name__ == "__main__":
    key = jax.random.PRNGKey(0)
    k_x, k_w1, k_w2 = jax.random.split(key, 3)

    # inplanes = planes = 4 (identity residual), small spatial size.
    N, C, H, W = 2, 4, 16, 16
    x = jax.random.normal(k_x, (N, C, H, W), jnp.float32)
    w1 = 0.1 * jax.random.normal(k_w1, (C, C, 3, 3), jnp.float32)   # conv1.weight (OIHW)
    w2 = 0.1 * jax.random.normal(k_w2, (C, C, 3, 3), jnp.float32)   # conv2.weight (OIHW)

    out = jax.block_until_ready(basic_encode_block(x, w1, w2))

    ref = reference_forward(x, w1, w2)
    assert out.shape == ref.shape == (N, C, H, W)
    # bf16 MXU operands with f32 accumulation vs. an f32 HIGHEST reference:
    # tolerance loosened accordingly (accuracy/perf tradeoff, not a bug).
    max_err = float(jnp.max(jnp.abs(out - ref)))
    assert jnp.allclose(out, ref, atol=5e-2, rtol=1e-1), f"max abs err = {max_err}"

    print("KERNEL_OK")
</pallas_src>

<mosaic_0001>
module attributes {stable_mosaic.version = 11 : i64} {
  func.func @_fused_block_kernel(%arg0: i32, %arg1: memref<1x4x256xf32, #tpu.memory_space<vmem>>, %arg2: memref<4x36xbf16, #tpu.memory_space<vmem>>, %arg3: memref<4x36xbf16, #tpu.memory_space<vmem>>, %arg4: memref<1x4x256xf32, #tpu.memory_space<vmem>>, %arg5: memref<4x384xbf16, #tpu.memory_space<vmem>>, %arg6: memref<4x384xbf16, #tpu.memory_space<vmem>>, %arg7: memref<36x271xbf16, #tpu.memory_space<vmem>>) attributes {dimension_semantics = [#tpu.dimension_semantics<parallel>], iteration_bounds = array<i64: 2>, scalar_prefetch = 0 : i64, scratch_operands = 3 : i64, tpu.core_type = #tpu.core_type<tc>, window_params = [{transform_indices = @transform_0, window_bounds = array<i64: 1, 4, 256>}, {pipeline_mode = #tpu.pipeline_mode<synchronous>, transform_indices = @transform_1, window_bounds = array<i64: 4, 36>}, {pipeline_mode = #tpu.pipeline_mode<synchronous>, transform_indices = @transform_2, window_bounds = array<i64: 4, 36>}, {transform_indices = @transform_3, window_bounds = array<i64: 1, 4, 256>}]} {
    %cst = arith.constant 0.000000e+00 : bf16
    %0 = vector.broadcast %cst : bf16 to vector<4x1xbf16>
    %cst_0 = arith.constant 0.000000e+00 : bf16
    %1 = vector.broadcast %cst_0 : bf16 to vector<4x18xbf16>
    %cst_1 = arith.constant 0.000000e+00 : bf16
    %2 = vector.broadcast %cst_1 : bf16 to vector<4x95xbf16>
    %c0 = arith.constant 0 : index
    %c0_2 = arith.constant 0 : index
    %3 = vector.load %arg5[%c0, %c0_2] : memref<4x384xbf16, #tpu.memory_space<vmem>>, vector<4x18xbf16>
    tpu.vector_store %arg5[%c0, %c0_2], %1 {strides = array<i32>} : memref<4x384xbf16, #tpu.memory_space<vmem>>, vector<4x18xbf16>,
    %c0_3 = arith.constant 0 : index
    %c289 = arith.constant 289 : index
    %4 = vector.load %arg5[%c0_3, %c289] : memref<4x384xbf16, #tpu.memory_space<vmem>>, vector<4x95xbf16>
    tpu.vector_store %arg5[%c0_3, %c289], %2 {strides = array<i32>} : memref<4x384xbf16, #tpu.memory_space<vmem>>, vector<4x95xbf16>,
    %c0_4 = arith.constant 0 : index
    %c0_5 = arith.constant 0 : index
    %c0_6 = arith.constant 0 : index
    %5 = vector.load %arg1[%c0_4, %c0_5, %c0_6] : memref<1x4x256xf32, #tpu.memory_space<vmem>>, vector<1x4x16xf32>
    %6 = vector.shape_cast %5 : vector<1x4x16xf32> to vector<4x16xf32>
    %7 = arith.truncf %6 : vector<4x16xf32> to vector<4x16xbf16>
    %c0_7 = arith.constant 0 : index
    %c18 = arith.constant 18 : index
    %8 = vector.load %arg5[%c0_7, %c18] : memref<4x384xbf16, #tpu.memory_space<vmem>>, vector<4x16xbf16>
    tpu.vector_store %arg5[%c0_7, %c18], %7 {strides = array<i32>} : memref<4x384xbf16, #tpu.memory_space<vmem>>, vector<4x16xbf16>,
    %c0_8 = arith.constant 0 : index
    %c34 = arith.constant 34 : index
    %9 = vector.load %arg5[%c0_8, %c34] : memref<4x384xbf16, #tpu.memory_space<vmem>>, vector<4x1xbf16>
    tpu.vector_store %arg5[%c0_8, %c34], %0 {strides = array<i32>} : memref<4x384xbf16, #tpu.memory_space<vmem>>, vector<4x1xbf16>,
    %c0_9 = arith.constant 0 : index
    %c0_10 = arith.constant 0 : index
    %c16 = arith.constant 16 : index
    %10 = vector.load %arg1[%c0_9, %c0_10, %c16] : memref<1x4x256xf32, #tpu.memory_space<vmem>>, vector<1x4x16xf32>
    %11 = vector.shape_cast %10 : vector<1x4x16xf32> to vector<4x16xf32>
    %12 = arith.truncf %11 : vector<4x16xf32> to vector<4x16xbf16>
    %c0_11 = arith.constant 0 : index
    %c35 = arith.constant 35 : index
    %13 = vector.load %arg5[%c0_11, %c35] : memref<4x384xbf16, #tpu.memory_space<vmem>>, vector<4x16xbf16>
    tpu.vector_store %arg5[%c0_11, %c35], %12 {strides = array<i32>} : memref<4x384xbf16, #tpu.memory_space<vmem>>, vector<4x16xbf16>,
    %c0_12 = arith.constant 0 : index
    %c51 = arith.constant 51 : index
    %14 = vector.load %arg5[%c0_12, %c51] : memref<4x384xbf16, #tpu.memory_space<vmem>>, vector<4x1xbf16>
    tpu.vector_store %arg5[%c0_12, %c51], %0 {strides = array<i32>} : memref<4x384xbf16, #tpu.memory_space<vmem>>, vector<4x1xbf16>,
    %c0_13 = arith.constant 0 : index
    %c0_14 = arith.constant 0 : index
    %c32 = arith.constant 32 : index
    %15 = vector.load %arg1[%c0_13, %c0_14, %c32] : memref<1x4x256xf32, #tpu.memory_space<vmem>>, vector<1x4x16xf32>
    %16 = vector.shape_cast %15 : vector<1x4x16xf32> to vector<4x16xf32>
    %17 = arith.truncf %16 : vector<4x16xf32> to vector<4x16xbf16>
    %c0_15 = arith.constant 0 : index
    %c52 = arith.constant 52 : index
    %18 = vector.load %arg5[%c0_15, %c52] : memref<4x384xbf16, #tpu.memory_space<vmem>>, vector<4x16xbf16>
    tpu.vector_store %arg5[%c0_15, %c52], %17 {strides = array<i32>} : memref<4x384xbf16, #tpu.memory_space<vmem>>, vector<4x16xbf16>,
    %c0_16 = arith.constant 0 : index
    %c68 = arith.constant 68 : index
    %19 = vector.load %arg5[%c0_16, %c68] : memref<4x384xbf16, #tpu.memory_space<vmem>>, vector<4x1xbf16>
    tpu.vector_store %arg5[%c0_16, %c68], %0 {strides = array<i32>} : memref<4x384xbf16, #tpu.memory_space<vmem>>, vector<4x1xbf16>,
    %c0_17 = arith.constant 0 : index
    %c0_18 = arith.constant 0 : index
    %c48 = arith.constant 48 : index
    %20 = vector.load %arg1[%c0_17, %c0_18, %c48] : memref<1x4x256xf32, #tpu.memory_space<vmem>>, vector<1x4x16xf32>
    %21 = vector.shape_cast %20 : vector<1x4x16xf32> to vector<4x16xf32>
    %22 = arith.truncf %21 : vector<4x16xf32> to vector<4x16xbf16>
    %c0_19 = arith.constant 0 : index
    %c69 = arith.constant 69 : index
    %23 = vector.load %arg5[%c0_19, %c69] : memref<4x384xbf16, #tpu.memory_space<vmem>>, vector<4x16xbf16>
    tpu.vector_store %arg5[%c0_19, %c69], %22 {strides = array<i32>} : memref<4x384xbf16, #tpu.memory_space<vmem>>, vector<4x16xbf16>,
    %c0_20 = arith.constant 0 : index
    %c85 = arith.constant 85 : index
    %24 = vector.load %arg5[%c0_20, %c85] : memref<4x384xbf16, #tpu.memory_space<vmem>>, vector<4x1xbf16>
    tpu.vector_store %arg5[%c0_20, %c85], %0 {strides = array<i32>} : memref<4x384xbf16, #tpu.memory_space<vmem>>, vector<4x1xbf16>,
    %c0_21 = arith.constant 0 : index
    %c0_22 = arith.constant 0 : index
    %c64 = arith.constant 64 : index
    %25 = vector.load %arg1[%c0_21, %c0_22, %c64] : memref<1x4x256xf32, #tpu.memory_space<vmem>>, vector<1x4x16xf32>
    %26 = vector.shape_cast %25 : vector<1x4x16xf32> to vector<4x16xf32>
    %27 = arith.truncf %26 : vector<4x16xf32> to vector<4x16xbf16>
    %c0_23 = arith.constant 0 : index
    %c86 = arith.constant 86 : index
    %28 = vector.load %arg5[%c0_23, %c86] : memref<4x384xbf16, #tpu.memory_space<vmem>>, vector<4x16xbf16>
    tpu.vector_store %arg5[%c0_23, %c86], %27 {strides = array<i32>} : memref<4x384xbf16, #tpu.memory_space<vmem>>, vector<4x16xbf16>,
    %c0_24 = arith.constant 0 : index
    %c102 = arith.constant 102 : index
    %29 = vector.load %arg5[%c0_24, %c102] : memref<4x384xbf16, #tpu.memory_space<vmem>>, vector<4x1xbf16>
    tpu.vector_store %arg5[%c0_24, %c102], %0 {strides = array<i32>} : memref<4x384xbf16, #tpu.memory_space<vmem>>, vector<4x1xbf16>,
    %c0_25 = arith.constant 0 : index
    %c0_26 = arith.constant 0 : index
    %c80 = arith.constant 80 : index
    %30 = vector.load %arg1[%c0_25, %c0_26, %c80] : memref<1x4x256xf32, #tpu.memory_space<vmem>>, vector<1x4x16xf32>
    %31 = vector.shape_cast %30 : vector<1x4x16xf32> to vector<4x16xf32>
    %32 = arith.truncf %31 : vector<4x16xf32> to vector<4x16xbf16>
    %c0_27 = arith.constant 0 : index
    %c103 = arith.constant 103 : index
    %33 = vector.load %arg5[%c0_27, %c103] : memref<4x384xbf16, #tpu.memory_space<vmem>>, vector<4x16xbf16>
    tpu.vector_store %arg5[%c0_27, %c103], %32 {strides = array<i32>} : memref<4x384xbf16, #tpu.memory_space<vmem>>, vector<4x16xbf16>,
    %c0_28 = arith.constant 0 : index
    %c119 = arith.constant 119 : index
    %34 = vector.load %arg5[%c0_28, %c119] : memref<4x384xbf16, #tpu.memory_space<vmem>>, vector<4x1xbf16>
    tpu.vector_store %arg5[%c0_28, %c119], %0 {strides = array<i32>} : memref<4x384xbf16, #tpu.memory_space<vmem>>, vector<4x1xbf16>,
    %c0_29 = arith.constant 0 : index
    %c0_30 = arith.constant 0 : index
    %c96 = arith.constant 96 : index
    %35 = vector.load %arg1[%c0_29, %c0_30, %c96] : memref<1x4x256xf32, #tpu.memory_space<vmem>>, vector<1x4x16xf32>
    %36 = vector.shape_cast %35 : vector<1x4x16xf32> to vector<4x16xf32>
    %37 = arith.truncf %36 : vector<4x16xf32> to vector<4x16xbf16>
    %c0_31 = arith.constant 0 : index
    %c120 = arith.constant 120 : index
    %38 = vector.load %arg5[%c0_31, %c120] : memref<4x384xbf16, #tpu.memory_space<vmem>>, vector<4x16xbf16>
    tpu.vector_store %arg5[%c0_31, %c120], %37 {strides = array<i32>} : memref<4x384xbf16, #tpu.memory_space<vmem>>, vector<4x16xbf16>,
    %c0_32 = arith.constant 0 : index
    %c136 = arith.constant 136 : index
    %39 = vector.load %arg5[%c0_32, %c136] : memref<4x384xbf16, #tpu.memory_space<vmem>>, vector<4x1xbf16>
    tpu.vector_store %arg5[%c0_32, %c136], %0 {strides = array<i32>} : memref<4x384xbf16, #tpu.memory_space<vmem>>, vector<4x1xbf16>,
    %c0_33 = arith.constant 0 : index
    %c0_34 = arith.constant 0 : index
    %c112 = arith.constant 112 : index
    %40 = vector.load %arg1[%c0_33, %c0_34, %c112] : memref<1x4x256xf32, #tpu.memory_space<vmem>>, vector<1x4x16xf32>
    %41 = vector.shape_cast %40 : vector<1x4x16xf32> to vector<4x16xf32>
    %42 = arith.truncf %41 : vector<4x16xf32> to vector<4x16xbf16>
    %c0_35 = arith.constant 0 : index
    %c137 = arith.constant 137 : index
    %43 = vector.load %arg5[%c0_35, %c137] : memref<4x384xbf16, #tpu.memory_space<vmem>>, vector<4x16xbf16>
    tpu.vector_store %arg5[%c0_35, %c137], %42 {strides = array<i32>} : memref<4x384xbf16, #tpu.memory_space<vmem>>, vector<4x16xbf16>,
    %c0_36 = arith.constant 0 : index
    %c153 = arith.constant 153 : index
    %44 = vector.load %arg5[%c0_36, %c153] : memref<4x384xbf16, #tpu.memory_space<vmem>>, vector<4x1xbf16>
    tpu.vector_store %arg5[%c0_36, %c153], %0 {strides = array<i32>} : memref<4x384xbf16, #tpu.memory_space<vmem>>, vector<4x1xbf16>,
    %c0_37 = arith.constant 0 : index
    %c0_38 = arith.constant 0 : index
    %c128 = arith.constant 128 : index
    %45 = vector.load %arg1[%c0_37, %c0_38, %c128] : memref<1x4x256xf32, #tpu.memory_space<vmem>>, vector<1x4x16xf32>
    %46 = vector.shape_cast %45 : vector<1x4x16xf32> to vector<4x16xf32>
    %47 = arith.truncf %46 : vector<4x16xf32> to vector<4x16xbf16>
    %c0_39 = arith.constant 0 : index
    %c154 = arith.constant 154 : index
    %48 = vector.load %arg5[%c0_39, %c154] : memref<4x384xbf16, #tpu.memory_space<vmem>>, vector<4x16xbf16>
    tpu.vector_store %arg5[%c0_39, %c154], %47 {strides = array<i32>} : memref<4x384xbf16, #tpu.memory_space<vmem>>, vector<4x16xbf16>,
    %c0_40 = arith.constant 0 : index
    %c170 = arith.constant 170 : index
    %49 = vector.load %arg5[%c0_40, %c170] : memref<4x384xbf16, #tpu.memory_space<vmem>>, vector<4x1xbf16>
    tpu.vector_store %arg5[%c0_40, %c170], %0 {strides = array<i32>} : memref<4x384xbf16, #tpu.memory_space<vmem>>, vector<4x1xbf16>,
    %c0_41 = arith.constant 0 : index
    %c0_42 = arith.constant 0 : index
    %c144 = arith.constant 144 : index
    %50 = vector.load %arg1[%c0_41, %c0_42, %c144] : memref<1x4x256xf32, #tpu.memory_space<vmem>>, vector<1x4x16xf32>
    %51 = vector.shape_cast %50 : vector<1x4x16xf32> to vector<4x16xf32>
    %52 = arith.truncf %51 : vector<4x16xf32> to vector<4x16xbf16>
    %c0_43 = arith.constant 0 : index
    %c171 = arith.constant 171 : index
    %53 = vector.load %arg5[%c0_43, %c171] : memref<4x384xbf16, #tpu.memory_space<vmem>>, vector<4x16xbf16>
    tpu.vector_store %arg5[%c0_43, %c171], %52 {strides = array<i32>} : memref<4x384xbf16, #tpu.memory_space<vmem>>, vector<4x16xbf16>,
    %c0_44 = arith.constant 0 : index
    %c187 = arith.constant 187 : index
    %54 = vector.load %arg5[%c0_44, %c187] : memref<4x384xbf16, #tpu.memory_space<vmem>>, vector<4x1xbf16>
    tpu.vector_store %arg5[%c0_44, %c187], %0 {strides = array<i32>} : memref<4x384xbf16, #tpu.memory_space<vmem>>, vector<4x1xbf16>,
    %c0_45 = arith.constant 0 : index
    %c0_46 = arith.constant 0 : index
    %c160 = arith.constant 160 : index
    %55 = vector.load %arg1[%c0_45, %c0_46, %c160] : memref<1x4x256xf32, #tpu.memory_space<vmem>>, vector<1x4x16xf32>
    %56 = vector.shape_cast %55 : vector<1x4x16xf32> to vector<4x16xf32>
    %57 = arith.truncf %56 : vector<4x16xf32> to vector<4x16xbf16>
    %c0_47 = arith.constant 0 : index
    %c188 = arith.constant 188 : index
    %58 = vector.load %arg5[%c0_47, %c188] : memref<4x384xbf16, #tpu.memory_space<vmem>>, vector<4x16xbf16>
    tpu.vector_store %arg5[%c0_47, %c188], %57 {strides = array<i32>} : memref<4x384xbf16, #tpu.memory_space<vmem>>, vector<4x16xbf16>,
    %c0_48 = arith.constant 0 : index
    %c204 = arith.constant 204 : index
    %59 = vector.load %arg5[%c0_48, %c204] : memref<4x384xbf16, #tpu.memory_space<vmem>>, vector<4x1xbf16>
    tpu.vector_store %arg5[%c0_48, %c204], %0 {strides = array<i32>} : memref<4x384xbf16, #tpu.memory_space<vmem>>, vector<4x1xbf16>,
    %c0_49 = arith.constant 0 : index
    %c0_50 = arith.constant 0 : index
    %c176 = arith.constant 176 : index
    %60 = vector.load %arg1[%c0_49, %c0_50, %c176] : memref<1x4x256xf32, #tpu.memory_space<vmem>>, vector<1x4x16xf32>
    %61 = vector.shape_cast %60 : vector<1x4x16xf32> to vector<4x16xf32>
    %62 = arith.truncf %61 : vector<4x16xf32> to vector<4x16xbf16>
    %c0_51 = arith.constant 0 : index
    %c205 = arith.constant 205 : index
    %63 = vector.load %arg5[%c0_51, %c205] : memref<4x384xbf16, #tpu.memory_space<vmem>>, vector<4x16xbf16>
    tpu.vector_store %arg5[%c0_51, %c205], %62 {strides = array<i32>} : memref<4x384xbf16, #tpu.memory_space<vmem>>, vector<4x16xbf16>,
    %c0_52 = arith.constant 0 : index
    %c221 = arith.constant 221 : index
    %64 = vector.load %arg5[%c0_52, %c221] : memref<4x384xbf16, #tpu.memory_space<vmem>>, vector<4x1xbf16>
    tpu.vector_store %arg5[%c0_52, %c221], %0 {strides = array<i32>} : memref<4x384xbf16, #tpu.memory_space<vmem>>, vector<4x1xbf16>,
    %c0_53 = arith.constant 0 : index
    %c0_54 = arith.constant 0 : index
    %c192 = arith.constant 192 : index
    %65 = vector.load %arg1[%c0_53, %c0_54, %c192] : memref<1x4x256xf32, #tpu.memory_space<vmem>>, vector<1x4x16xf32>
    %66 = vector.shape_cast %65 : vector<1x4x16xf32> to vector<4x16xf32>
    %67 = arith.truncf %66 : vector<4x16xf32> to vector<4x16xbf16>
    %c0_55 = arith.constant 0 : index
    %c222 = arith.constant 222 : index
    %68 = vector.load %arg5[%c0_55, %c222] : memref<4x384xbf16, #tpu.memory_space<vmem>>, vector<4x16xbf16>
    tpu.vector_store %arg5[%c0_55, %c222], %67 {strides = array<i32>} : memref<4x384xbf16, #tpu.memory_space<vmem>>, vector<4x16xbf16>,
    %c0_56 = arith.constant 0 : index
    %c238 = arith.constant 238 : index
    %69 = vector.load %arg5[%c0_56, %c238] : memref<4x384xbf16, #tpu.memory_space<vmem>>, vector<4x1xbf16>
    tpu.vector_store %arg5[%c0_56, %c238], %0 {strides = array<i32>} : memref<4x384xbf16, #tpu.memory_space<vmem>>, vector<4x1xbf16>,
    %c0_57 = arith.constant 0 : index
    %c0_58 = arith.constant 0 : index
    %c208 = arith.constant 208 : index
    %70 = vector.load %arg1[%c0_57, %c0_58, %c208] : memref<1x4x256xf32, #tpu.memory_space<vmem>>, vector<1x4x16xf32>
    %71 = vector.shape_cast %70 : vector<1x4x16xf32> to vector<4x16xf32>
    %72 = arith.truncf %71 : vector<4x16xf32> to vector<4x16xbf16>
    %c0_59 = arith.constant 0 : index
    %c239 = arith.constant 239 : index
    %73 = vector.load %arg5[%c0_59, %c239] : memref<4x384xbf16, #tpu.memory_space<vmem>>, vector<4x16xbf16>
    tpu.vector_store %arg5[%c0_59, %c239], %72 {strides = array<i32>} : memref<4x384xbf16, #tpu.memory_space<vmem>>, vector<4x16xbf16>,
    %c0_60 = arith.constant 0 : index
    %c255 = arith.constant 255 : index
    %74 = vector.load %arg5[%c0_60, %c255] : memref<4x384xbf16, #tpu.memory_space<vmem>>, vector<4x1xbf16>
    tpu.vector_store %arg5[%c0_60, %c255], %0 {strides = array<i32>} : memref<4x384xbf16, #tpu.memory_space<vmem>>, vector<4x1xbf16>,
    %c0_61 = arith.constant 0 : index
    %c0_62 = arith.constant 0 : index
    %c224 = arith.constant 224 : index
    %75 = vector.load %arg1[%c0_61, %c0_62, %c224] : memref<1x4x256xf32, #tpu.memory_space<vmem>>, vector<1x4x16xf32>
    %76 = vector.shape_cast %75 : vector<1x4x16xf32> to vector<4x16xf32>
    %77 = arith.truncf %76 : vector<4x16xf32> to vector<4x16xbf16>
    %c0_63 = arith.constant 0 : index
    %c256 = arith.constant 256 : index
    %78 = vector.load %arg5[%c0_63, %c256] : memref<4x384xbf16, #tpu.memory_space<vmem>>, vector<4x16xbf16>
    tpu.vector_store %arg5[%c0_63, %c256], %77 {strides = array<i32>} : memref<4x384xbf16, #tpu.memory_space<vmem>>, vector<4x16xbf16>,
    %c0_64 = arith.constant 0 : index
    %c272 = arith.constant 272 : index
    %79 = vector.load %arg5[%c0_64, %c272] : memref<4x384xbf16, #tpu.memory_space<vmem>>, vector<4x1xbf16>
    tpu.vector_store %arg5[%c0_64, %c272], %0 {strides = array<i32>} : memref<4x384xbf16, #tpu.memory_space<vmem>>, vector<4x1xbf16>,
    %c0_65 = arith.constant 0 : index
    %c0_66 = arith.constant 0 : index
    %c240 = arith.constant 240 : index
    %80 = vector.load %arg1[%c0_65, %c0_66, %c240] : memref<1x4x256xf32, #tpu.memory_space<vmem>>, vector<1x4x16xf32>
    %81 = vector.shape_cast %80 : vector<1x4x16xf32> to vector<4x16xf32>
    %82 = arith.truncf %81 : vector<4x16xf32> to vector<4x16xbf16>
    %c0_67 = arith.constant 0 : index
    %c273 = arith.constant 273 : index
    %83 = vector.load %arg5[%c0_67, %c273] : memref<4x384xbf16, #tpu.memory_space<vmem>>, vector<4x16xbf16>
    tpu.vector_store %arg5[%c0_67, %c273], %82 {strides = array<i32>} : memref<4x384xbf16, #tpu.memory_space<vmem>>, vector<4x16xbf16>,
    %c0_68 = arith.constant 0 : index
    %c289_69 = arith.constant 289 : index
    %84 = vector.load %arg5[%c0_68, %c289_69] : memref<4x384xbf16, #tpu.memory_space<vmem>>, vector<4x1xbf16>
    tpu.vector_store %arg5[%c0_68, %c289_69], %0 {strides = array<i32>} : memref<4x384xbf16, #tpu.memory_space<vmem>>, vector<4x1xbf16>,
    %c0_70 = arith.constant 0 : index
    %c0_71 = arith.constant 0 : index
    %85 = vector.load %arg2[%c0_70, %c0_71] : memref<4x36xbf16, #tpu.memory_space<vmem>>, vector<4x36xbf16>
    %c0_72 = arith.constant 0 : index
    %c0_73 = arith.constant 0 : index
    %86 = vector.load %arg3[%c0_72, %c0_73] : memref<4x36xbf16, #tpu.memory_space<vmem>>, vector<4x36xbf16>
    %c0_74 = arith.constant 0 : index
    %c0_75 = arith.constant 0 : index
    %87 = vector.load %arg5[%c0_74, %c0_75] : memref<4x384xbf16, #tpu.memory_space<vmem>>, vector<4x271xbf16>
    %c0_76 = arith.constant 0 : index
    %c0_77 = arith.constant 0 : index
    %88 = vector.load %arg7[%c0_76, %c0_77] : memref<36x271xbf16, #tpu.memory_space<vmem>>, vector<4x271xbf16>
    tpu.vector_store %arg7[%c0_76, %c0_77], %87 {strides = array<i32>} : memref<36x271xbf16, #tpu.memory_space<vmem>>, vector<4x271xbf16>,
    %c0_78 = arith.constant 0 : index
    %c1 = arith.constant 1 : index
    %89 = vector.load %arg5[%c0_78, %c1] : memref<4x384xbf16, #tpu.memory_space<vmem>>, vector<4x271xbf16>
    %c4 = arith.constant 4 : index
    %c0_79 = arith.constant 0 : index
    %90 = vector.load %arg7[%c4, %c0_79] : memref<36x271xbf16, #tpu.memory_space<vmem>>, vector<4x271xbf16>
    tpu.vector_store %arg7[%c4, %c0_79], %89 {strides = array<i32>} : memref<36x271xbf16, #tpu.memory_space<vmem>>, vector<4x271xbf16>,
    %c0_80 = arith.constant 0 : index
    %c2 = arith.constant 2 : index
    %91 = vector.load %arg5[%c0_80, %c2] : memref<4x384xbf16, #tpu.memory_space<vmem>>, vector<4x271xbf16>
    %c8 = arith.constant 8 : index
    %c0_81 = arith.constant 0 : index
    %92 = vector.load %arg7[%c8, %c0_81] : memref<36x271xbf16, #tpu.memory_space<vmem>>, vector<4x271xbf16>
    tpu.vector_store %arg7[%c8, %c0_81], %91 {strides = array<i32>} : memref<36x271xbf16, #tpu.memory_space<vmem>>, vector<4x271xbf16>,
    %c0_82 = arith.constant 0 : index
    %c17 = arith.constant 17 : index
    %93 = vector.load %arg5[%c0_82, %c17] : memref<4x384xbf16, #tpu.memory_space<vmem>>, vector<4x271xbf16>
    %c12 = arith.constant 12 : index
    %c0_83 = arith.constant 0 : index
    %94 = vector.load %arg7[%c12, %c0_83] : memref<36x271xbf16, #tpu.memory_space<vmem>>, vector<4x271xbf16>
    tpu.vector_store %arg7[%c12, %c0_83], %93 {strides = array<i32>} : memref<36x271xbf16, #tpu.memory_space<vmem>>, vector<4x271xbf16>,
    %c0_84 = arith.constant 0 : index
    %c18_85 = arith.constant 18 : index
    %95 = vector.load %arg5[%c0_84, %c18_85] : memref<4x384xbf16, #tpu.memory_space<vmem>>, vector<4x271xbf16>
    %c16_86 = arith.constant 16 : index
    %c0_87 = arith.constant 0 : index
    %96 = vector.load %arg7[%c16_86, %c0_87] : memref<36x271xbf16, #tpu.memory_space<vmem>>, vector<4x271xbf16>
    tpu.vector_store %arg7[%c16_86, %c0_87], %95 {strides = array<i32>} : memref<36x271xbf16, #tpu.memory_space<vmem>>, vector<4x271xbf16>,
    %c0_88 = arith.constant 0 : index
    %c19 = arith.constant 19 : index
    %97 = vector.load %arg5[%c0_88, %c19] : memref<4x384xbf16, #tpu.memory_space<vmem>>, vector<4x271xbf16>
    %c20 = arith.constant 20 : index
    %c0_89 = arith.constant 0 : index
    %98 = vector.load %arg7[%c20, %c0_89] : memref<36x271xbf16, #tpu.memory_space<vmem>>, vector<4x271xbf16>
    tpu.vector_store %arg7[%c20, %c0_89], %97 {strides = array<i32>} : memref<36x271xbf16, #tpu.memory_space<vmem>>, vector<4x271xbf16>,
    %c0_90 = arith.constant 0 : index
    %c34_91 = arith.constant 34 : index
    %99 = vector.load %arg5[%c0_90, %c34_91] : memref<4x384xbf16, #tpu.memory_space<vmem>>, vector<4x271xbf16>
    %c24 = arith.constant 24 : index
    %c0_92 = arith.constant 0 : index
    %100 = vector.load %arg7[%c24, %c0_92] : memref<36x271xbf16, #tpu.memory_space<vmem>>, vector<4x271xbf16>
    tpu.vector_store %arg7[%c24, %c0_92], %99 {strides = array<i32>} : memref<36x271xbf16, #tpu.memory_space<vmem>>, vector<4x271xbf16>,
    %c0_93 = arith.constant 0 : index
    %c35_94 = arith.constant 35 : index
    %101 = vector.load %arg5[%c0_93, %c35_94] : memref<4x384xbf16, #tpu.memory_space<vmem>>, vector<4x271xbf16>
    %c28 = arith.constant 28 : index
    %c0_95 = arith.constant 0 : index
    %102 = vector.load %arg7[%c28, %c0_95] : memref<36x271xbf16, #tpu.memory_space<vmem>>, vector<4x271xbf16>
    tpu.vector_store %arg7[%c28, %c0_95], %101 {strides = array<i32>} : memref<36x271xbf16, #tpu.memory_space<vmem>>, vector<4x271xbf16>,
    %c0_96 = arith.constant 0 : index
    %c36 = arith.constant 36 : index
    %103 = vector.load %arg5[%c0_96, %c36] : memref<4x384xbf16, #tpu.memory_space<vmem>>, vector<4x271xbf16>
    %c32_97 = arith.constant 32 : index
    %c0_98 = arith.constant 0 : index
    %104 = vector.load %arg7[%c32_97, %c0_98] : memref<36x271xbf16, #tpu.memory_space<vmem>>, vector<4x271xbf16>
    tpu.vector_store %arg7[%c32_97, %c0_98], %103 {strides = array<i32>} : memref<36x271xbf16, #tpu.memory_space<vmem>>, vector<4x271xbf16>,
    %c0_99 = arith.constant 0 : index
    %c0_100 = arith.constant 0 : index
    %105 = vector.load %arg7[%c0_99, %c0_100] : memref<36x271xbf16, #tpu.memory_space<vmem>>, vector<36x271xbf16>
    %cst_101 = arith.constant dense<0.000000e+00> : vector<4x271xf32>
    %106 = tpu.matmul %85, %105, %cst_101 {dimension_numbers = #tpu.dot_dimension_numbers<[1], [0], [0], [1], [0, 0, 1, 1], [], []>} : vector<4x36xbf16>, vector<36x271xbf16>, vector<4x271xf32> -> vector<4x271xf32>
    %cst_102 = arith.constant 0.000000e+00 : f32
    %107 = vector.broadcast %cst_102 : f32 to vector<4x271xf32>
    %108 = arith.maximumf %106, %107 : vector<4x271xf32>
    %109 = arith.truncf %108 : vector<4x271xf32> to vector<4x271xbf16>
    %c0_103 = arith.constant 0 : index
    %c0_104 = arith.constant 0 : index
    %110 = vector.load %arg6[%c0_103, %c0_104] : memref<4x384xbf16, #tpu.memory_space<vmem>>, vector<4x18xbf16>
    tpu.vector_store %arg6[%c0_103, %c0_104], %1 {strides = array<i32>} : memref<4x384xbf16, #tpu.memory_space<vmem>>, vector<4x18xbf16>,
    %c0_105 = arith.constant 0 : index
    %c289_106 = arith.constant 289 : index
    %111 = vector.load %arg6[%c0_105, %c289_106] : memref<4x384xbf16, #tpu.memory_space<vmem>>, vector<4x95xbf16>
    tpu.vector_store %arg6[%c0_105, %c289_106], %2 {strides = array<i32>} : memref<4x384xbf16, #tpu.memory_space<vmem>>, vector<4x95xbf16>,
    %c0_107 = arith.constant 0 : index
    %c18_108 = arith.constant 18 : index
    %112 = vector.load %arg6[%c0_107, %c18_108] : memref<4x384xbf16, #tpu.memory_space<vmem>>, vector<4x271xbf16>
    tpu.vector_store %arg6[%c0_107, %c18_108], %109 {strides = array<i32>} : memref<4x384xbf16, #tpu.memory_space<vmem>>, vector<4x271xbf16>,
    %c0_109 = arith.constant 0 : index
    %c34_110 = arith.constant 34 : index
    %113 = vector.load %arg6[%c0_109, %c34_110] : memref<4x384xbf16, #tpu.memory_space<vmem>>, vector<4x1xbf16>
    tpu.vector_store %arg6[%c0_109, %c34_110], %0 {strides = array<i32>} : memref<4x384xbf16, #tpu.memory_space<vmem>>, vector<4x1xbf16>,
    %c0_111 = arith.constant 0 : index
    %c51_112 = arith.constant 51 : index
    %114 = vector.load %arg6[%c0_111, %c51_112] : memref<4x384xbf16, #tpu.memory_space<vmem>>, vector<4x1xbf16>
    tpu.vector_store %arg6[%c0_111, %c51_112], %0 {strides = array<i32>} : memref<4x384xbf16, #tpu.memory_space<vmem>>, vector<4x1xbf16>,
    %c0_113 = arith.constant 0 : index
    %c68_114 = arith.constant 68 : index
    %115 = vector.load %arg6[%c0_113, %c68_114] : memref<4x384xbf16, #tpu.memory_space<vmem>>, vector<4x1xbf16>
    tpu.vector_store %arg6[%c0_113, %c68_114], %0 {strides = array<i32>} : memref<4x384xbf16, #tpu.memory_space<vmem>>, vector<4x1xbf16>,
    %c0_115 = arith.constant 0 : index
    %c85_116 = arith.constant 85 : index
    %116 = vector.load %arg6[%c0_115, %c85_116] : memref<4x384xbf16, #tpu.memory_space<vmem>>, vector<4x1xbf16>
    tpu.vector_store %arg6[%c0_115, %c85_116], %0 {strides = array<i32>} : memref<4x384xbf16, #tpu.memory_space<vmem>>, vector<4x1xbf16>,
    %c0_117 = arith.constant 0 : index
    %c102_118 = arith.constant 102 : index
    %117 = vector.load %arg6[%c0_117, %c102_118] : memref<4x384xbf16, #tpu.memory_space<vmem>>, vector<4x1xbf16>
    tpu.vector_store %arg6[%c0_117, %c102_118], %0 {strides = array<i32>} : memref<4x384xbf16, #tpu.memory_space<vmem>>, vector<4x1xbf16>,
    %c0_119 = arith.constant 0 : index
    %c119_120 = arith.constant 119 : index
    %118 = vector.load %arg6[%c0_119, %c119_120] : memref<4x384xbf16, #tpu.memory_space<vmem>>, vector<4x1xbf16>
    tpu.vector_store %arg6[%c0_119, %c119_120], %0 {strides = array<i32>} : memref<4x384xbf16, #tpu.memory_space<vmem>>, vector<4x1xbf16>,
    %c0_121 = arith.constant 0 : index
    %c136_122 = arith.constant 136 : index
    %119 = vector.load %arg6[%c0_121, %c136_122] : memref<4x384xbf16, #tpu.memory_space<vmem>>, vector<4x1xbf16>
    tpu.vector_store %arg6[%c0_121, %c136_122], %0 {strides = array<i32>} : memref<4x384xbf16, #tpu.memory_space<vmem>>, vector<4x1xbf16>,
    %c0_123 = arith.constant 0 : index
    %c153_124 = arith.constant 153 : index
    %120 = vector.load %arg6[%c0_123, %c153_124] : memref<4x384xbf16, #tpu.memory_space<vmem>>, vector<4x1xbf16>
    tpu.vector_store %arg6[%c0_123, %c153_124], %0 {strides = array<i32>} : memref<4x384xbf16, #tpu.memory_space<vmem>>, vector<4x1xbf16>,
    %c0_125 = arith.constant 0 : index
    %c170_126 = arith.constant 170 : index
    %121 = vector.load %arg6[%c0_125, %c170_126] : memref<4x384xbf16, #tpu.memory_space<vmem>>, vector<4x1xbf16>
    tpu.vector_store %arg6[%c0_125, %c170_126], %0 {strides = array<i32>} : memref<4x384xbf16, #tpu.memory_space<vmem>>, vector<4x1xbf16>,
    %c0_127 = arith.constant 0 : index
    %c187_128 = arith.constant 187 : index
    %122 = vector.load %arg6[%c0_127, %c187_128] : memref<4x384xbf16, #tpu.memory_space<vmem>>, vector<4x1xbf16>
    tpu.vector_store %arg6[%c0_127, %c187_128], %0 {strides = array<i32>} : memref<4x384xbf16, #tpu.memory_space<vmem>>, vector<4x1xbf16>,
    %c0_129 = arith.constant 0 : index
    %c204_130 = arith.constant 204 : index
    %123 = vector.load %arg6[%c0_129, %c204_130] : memref<4x384xbf16, #tpu.memory_space<vmem>>, vector<4x1xbf16>
    tpu.vector_store %arg6[%c0_129, %c204_130], %0 {strides = array<i32>} : memref<4x384xbf16, #tpu.memory_space<vmem>>, vector<4x1xbf16>,
    %c0_131 = arith.constant 0 : index
    %c221_132 = arith.constant 221 : index
    %124 = vector.load %arg6[%c0_131, %c221_132] : memref<4x384xbf16, #tpu.memory_space<vmem>>, vector<4x1xbf16>
    tpu.vector_store %arg6[%c0_131, %c221_132], %0 {strides = array<i32>} : memref<4x384xbf16, #tpu.memory_space<vmem>>, vector<4x1xbf16>,
    %c0_133 = arith.constant 0 : index
    %c238_134 = arith.constant 238 : index
    %125 = vector.load %arg6[%c0_133, %c238_134] : memref<4x384xbf16, #tpu.memory_space<vmem>>, vector<4x1xbf16>
    tpu.vector_store %arg6[%c0_133, %c238_134], %0 {strides = array<i32>} : memref<4x384xbf16, #tpu.memory_space<vmem>>, vector<4x1xbf16>,
    %c0_135 = arith.constant 0 : index
    %c255_136 = arith.constant 255 : index
    %126 = vector.load %arg6[%c0_135, %c255_136] : memref<4x384xbf16, #tpu.memory_space<vmem>>, vector<4x1xbf16>
    tpu.vector_store %arg6[%c0_135, %c255_136], %0 {strides = array<i32>} : memref<4x384xbf16, #tpu.memory_space<vmem>>, vector<4x1xbf16>,
    %c0_137 = arith.constant 0 : index
    %c272_138 = arith.constant 272 : index
    %127 = vector.load %arg6[%c0_137, %c272_138] : memref<4x384xbf16, #tpu.memory_space<vmem>>, vector<4x1xbf16>
    tpu.vector_store %arg6[%c0_137, %c272_138], %0 {strides = array<i32>} : memref<4x384xbf16, #tpu.memory_space<vmem>>, vector<4x1xbf16>,
    %c0_139 = arith.constant 0 : index
    %c0_140 = arith.constant 0 : index
    %128 = vector.load %arg6[%c0_139, %c0_140] : memref<4x384xbf16, #tpu.memory_space<vmem>>, vector<4x271xbf16>
    %c0_141 = arith.constant 0 : index
    %c0_142 = arith.constant 0 : index
    %129 = vector.load %arg7[%c0_141, %c0_142] : memref<36x271xbf16, #tpu.memory_space<vmem>>, vector<4x271xbf16>
    tpu.vector_store %arg7[%c0_141, %c0_142], %128 {strides = array<i32>} : memref<36x271xbf16, #tpu.memory_space<vmem>>, vector<4x271xbf16>,
    %c0_143 = arith.constant 0 : index
    %c1_144 = arith.constant 1 : index
    %130 = vector.load %arg6[%c0_143, %c1_144] : memref<4x384xbf16, #tpu.memory_space<vmem>>, vector<4x271xbf16>
    %c4_145 = arith.constant 4 : index
    %c0_146 = arith.constant 0 : index
    %131 = vector.load %arg7[%c4_145, %c0_146] : memref<36x271xbf16, #tpu.memory_space<vmem>>, vector<4x271xbf16>
    tpu.vector_store %arg7[%c4_145, %c0_146], %130 {strides = array<i32>} : memref<36x271xbf16, #tpu.memory_space<vmem>>, vector<4x271xbf16>,
    %c0_147 = arith.constant 0 : index
    %c2_148 = arith.constant 2 : index
    %132 = vector.load %arg6[%c0_147, %c2_148] : memref<4x384xbf16, #tpu.memory_space<vmem>>, vector<4x271xbf16>
    %c8_149 = arith.constant 8 : index
    %c0_150 = arith.constant 0 : index
    %133 = vector.load %arg7[%c8_149, %c0_150] : memref<36x271xbf16, #tpu.memory_space<vmem>>, vector<4x271xbf16>
    tpu.vector_store %arg7[%c8_149, %c0_150], %132 {strides = array<i32>} : memref<36x271xbf16, #tpu.memory_space<vmem>>, vector<4x271xbf16>,
    %c0_151 = arith.constant 0 : index
    %c17_152 = arith.constant 17 : index
    %134 = vector.load %arg6[%c0_151, %c17_152] : memref<4x384xbf16, #tpu.memory_space<vmem>>, vector<4x271xbf16>
    %c12_153 = arith.constant 12 : index
    %c0_154 = arith.constant 0 : index
    %135 = vector.load %arg7[%c12_153, %c0_154] : memref<36x271xbf16, #tpu.memory_space<vmem>>, vector<4x271xbf16>
    tpu.vector_store %arg7[%c12_153, %c0_154], %134 {strides = array<i32>} : memref<36x271xbf16, #tpu.memory_space<vmem>>, vector<4x271xbf16>,
    %c0_155 = arith.constant 0 : index
    %c18_156 = arith.constant 18 : index
    %136 = vector.load %arg6[%c0_155, %c18_156] : memref<4x384xbf16, #tpu.memory_space<vmem>>, vector<4x271xbf16>
    %c16_157 = arith.constant 16 : index
    %c0_158 = arith.constant 0 : index
    %137 = vector.load %arg7[%c16_157, %c0_158] : memref<36x271xbf16, #tpu.memory_space<vmem>>, vector<4x271xbf16>
    tpu.vector_store %arg7[%c16_157, %c0_158], %136 {strides = array<i32>} : memref<36x271xbf16, #tpu.memory_space<vmem>>, vector<4x271xbf16>,
    %c0_159 = arith.constant 0 : index
    %c19_160 = arith.constant 19 : index
    %138 = vector.load %arg6[%c0_159, %c19_160] : memref<4x384xbf16, #tpu.memory_space<vmem>>, vector<4x271xbf16>
    %c20_161 = arith.constant 20 : index
    %c0_162 = arith.constant 0 : index
    %139 = vector.load %arg7[%c20_161, %c0_162] : memref<36x271xbf16, #tpu.memory_space<vmem>>, vector<4x271xbf16>
    tpu.vector_store %arg7[%c20_161, %c0_162], %138 {strides = array<i32>} : memref<36x271xbf16, #tpu.memory_space<vmem>>, vector<4x271xbf16>,
    %c0_163 = arith.constant 0 : index
    %c34_164 = arith.constant 34 : index
    %140 = vector.load %arg6[%c0_163, %c34_164] : memref<4x384xbf16, #tpu.memory_space<vmem>>, vector<4x271xbf16>
    %c24_165 = arith.constant 24 : index
    %c0_166 = arith.constant 0 : index
    %141 = vector.load %arg7[%c24_165, %c0_166] : memref<36x271xbf16, #tpu.memory_space<vmem>>, vector<4x271xbf16>
    tpu.vector_store %arg7[%c24_165, %c0_166], %140 {strides = array<i32>} : memref<36x271xbf16, #tpu.memory_space<vmem>>, vector<4x271xbf16>,
    %c0_167 = arith.constant 0 : index
    %c35_168 = arith.constant 35 : index
    %142 = vector.load %arg6[%c0_167, %c35_168] : memref<4x384xbf16, #tpu.memory_space<vmem>>, vector<4x271xbf16>
    %c28_169 = arith.constant 28 : index
    %c0_170 = arith.constant 0 : index
    %143 = vector.load %arg7[%c28_169, %c0_170] : memref<36x271xbf16, #tpu.memory_space<vmem>>, vector<4x271xbf16>
    tpu.vector_store %arg7[%c28_169, %c0_170], %142 {strides = array<i32>} : memref<36x271xbf16, #tpu.memory_space<vmem>>, vector<4x271xbf16>,
    %c0_171 = arith.constant 0 : index
    %c36_172 = arith.constant 36 : index
    %144 = vector.load %arg6[%c0_171, %c36_172] : memref<4x384xbf16, #tpu.memory_space<vmem>>, vector<4x271xbf16>
    %c32_173 = arith.constant 32 : index
    %c0_174 = arith.constant 0 : index
    %145 = vector.load %arg7[%c32_173, %c0_174] : memref<36x271xbf16, #tpu.memory_space<vmem>>, vector<4x271xbf16>
    tpu.vector_store %arg7[%c32_173, %c0_174], %144 {strides = array<i32>} : memref<36x271xbf16, #tpu.memory_space<vmem>>, vector<4x271xbf16>,
    %c0_175 = arith.constant 0 : index
    %c0_176 = arith.constant 0 : index
    %146 = vector.load %arg7[%c0_175, %c0_176] : memref<36x271xbf16, #tpu.memory_space<vmem>>, vector<36x271xbf16>
    %cst_177 = arith.constant dense<0.000000e+00> : vector<4x271xf32>
    %147 = tpu.matmul %86, %146, %cst_177 {dimension_numbers = #tpu.dot_dimension_numbers<[1], [0], [0], [1], [0, 0, 1, 1], [], []>} : vector<4x36xbf16>, vector<36x271xbf16>, vector<4x271xf32> -> vector<4x271xf32>
    %148 = vector.extract_strided_slice %147 {offsets = [0, 0], sizes = [4, 16], strides = [1, 1]} : vector<4x271xf32> to vector<4x16xf32>
    %c0_178 = arith.constant 0 : index
    %c0_179 = arith.constant 0 : index
    %c0_180 = arith.constant 0 : index
    %149 = vector.load %arg1[%c0_178, %c0_179, %c0_180] : memref<1x4x256xf32, #tpu.memory_space<vmem>>, vector<1x4x16xf32>
    %150 = vector.shape_cast %149 : vector<1x4x16xf32> to vector<4x16xf32>
    %151 = arith.addf %148, %150 : vector<4x16xf32>
    %cst_181 = arith.constant 0.000000e+00 : f32
    %152 = vector.broadcast %cst_181 : f32 to vector<4x16xf32>
    %153 = arith.maximumf %151, %152 : vector<4x16xf32>
    %c0_182 = arith.constant 0 : index
    %c0_183 = arith.constant 0 : index
    %c0_184 = arith.constant 0 : index
    %154 = vector.load %arg4[%c0_182, %c0_183, %c0_184] : memref<1x4x256xf32, #tpu.memory_space<vmem>>, vector<1x4x16xf32>
    %155 = vector.shape_cast %154 : vector<1x4x16xf32> to vector<4x16xf32>
    %156 = vector.shape_cast %153 : vector<4x16xf32> to vector<1x4x16xf32>
    tpu.vector_store %arg4[%c0_182, %c0_183, %c0_184], %156 {strides = array<i32>} : memref<1x4x256xf32, #tpu.memory_space<vmem>>, vector<1x4x16xf32>,
    %157 = vector.extract_strided_slice %147 {offsets = [0, 17], sizes = [4, 16], strides = [1, 1]} : vector<4x271xf32> to vector<4x16xf32>
    %c0_185 = arith.constant 0 : index
    %c0_186 = arith.constant 0 : index
    %c16_187 = arith.constant 16 : index
    %158 = vector.load %arg1[%c0_185, %c0_186, %c16_187] : memref<1x4x256xf32, #tpu.memory_space<vmem>>, vector<1x4x16xf32>
    %159 = vector.shape_cast %158 : vector<1x4x16xf32> to vector<4x16xf32>
    %160 = arith.addf %157, %159 : vector<4x16xf32>
    %cst_188 = arith.constant 0.000000e+00 : f32
    %161 = vector.broadcast %cst_188 : f32 to vector<4x16xf32>
    %162 = arith.maximumf %160, %161 : vector<4x16xf32>
    %c0_189 = arith.constant 0 : index
    %c0_190 = arith.constant 0 : index
    %c16_191 = arith.constant 16 : index
    %163 = vector.load %arg4[%c0_189, %c0_190, %c16_191] : memref<1x4x256xf32, #tpu.memory_space<vmem>>, vector<1x4x16xf32>
    %164 = vector.shape_cast %163 : vector<1x4x16xf32> to vector<4x16xf32>
    %165 = vector.shape_cast %162 : vector<4x16xf32> to vector<1x4x16xf32>
    tpu.vector_store %arg4[%c0_189, %c0_190, %c16_191], %165 {strides = array<i32>} : memref<1x4x256xf32, #tpu.memory_space<vmem>>, vector<1x4x16xf32>,
    %166 = vector.extract_strided_slice %147 {offsets = [0, 34], sizes = [4, 16], strides = [1, 1]} : vector<4x271xf32> to vector<4x16xf32>
    %c0_192 = arith.constant 0 : index
    %c0_193 = arith.constant 0 : index
    %c32_194 = arith.constant 32 : index
    %167 = vector.load %arg1[%c0_192, %c0_193, %c32_194] : memref<1x4x256xf32, #tpu.memory_space<vmem>>, vector<1x4x16xf32>
    %168 = vector.shape_cast %167 : vector<1x4x16xf32> to vector<4x16xf32>
    %169 = arith.addf %166, %168 : vector<4x16xf32>
    %cst_195 = arith.constant 0.000000e+00 : f32
    %170 = vector.broadcast %cst_195 : f32 to vector<4x16xf32>
    %171 = arith.maximumf %169, %170 : vector<4x16xf32>
    %c0_196 = arith.constant 0 : index
    %c0_197 = arith.constant 0 : index
    %c32_198 = arith.constant 32 : index
    %172 = vector.load %arg4[%c0_196, %c0_197, %c32_198] : memref<1x4x256xf32, #tpu.memory_space<vmem>>, vector<1x4x16xf32>
    %173 = vector.shape_cast %172 : vector<1x4x16xf32> to vector<4x16xf32>
    %174 = vector.shape_cast %171 : vector<4x16xf32> to vector<1x4x16xf32>
    tpu.vector_store %arg4[%c0_196, %c0_197, %c32_198], %174 {strides = array<i32>} : memref<1x4x256xf32, #tpu.memory_space<vmem>>, vector<1x4x16xf32>,
    %175 = vector.extract_strided_slice %147 {offsets = [0, 51], sizes = [4, 16], strides = [1, 1]} : vector<4x271xf32> to vector<4x16xf32>
    %c0_199 = arith.constant 0 : index
    %c0_200 = arith.constant 0 : index
    %c48_201 = arith.constant 48 : index
    %176 = vector.load %arg1[%c0_199, %c0_200, %c48_201] : memref<1x4x256xf32, #tpu.memory_space<vmem>>, vector<1x4x16xf32>
    %177 = vector.shape_cast %176 : vector<1x4x16xf32> to vector<4x16xf32>
    %178 = arith.addf %175, %177 : vector<4x16xf32>
    %cst_202 = arith.constant 0.000000e+00 : f32
    %179 = vector.broadcast %cst_202 : f32 to vector<4x16xf32>
    %180 = arith.maximumf %178, %179 : vector<4x16xf32>
    %c0_203 = arith.constant 0 : index
    %c0_204 = arith.constant 0 : index
    %c48_205 = arith.constant 48 : index
    %181 = vector.load %arg4[%c0_203, %c0_204, %c48_205] : memref<1x4x256xf32, #tpu.memory_space<vmem>>, vector<1x4x16xf32>
    %182 = vector.shape_cast %181 : vector<1x4x16xf32> to vector<4x16xf32>
    %183 = vector.shape_cast %180 : vector<4x16xf32> to vector<1x4x16xf32>
    tpu.vector_store %arg4[%c0_203, %c0_204, %c48_205], %183 {strides = array<i32>} : memref<1x4x256xf32, #tpu.memory_space<vmem>>, vector<1x4x16xf32>,
    %184 = vector.extract_strided_slice %147 {offsets = [0, 68], sizes = [4, 16], strides = [1, 1]} : vector<4x271xf32> to vector<4x16xf32>
    %c0_206 = arith.constant 0 : index
    %c0_207 = arith.constant 0 : index
    %c64_208 = arith.constant 64 : index
    %185 = vector.load %arg1[%c0_206, %c0_207, %c64_208] : memref<1x4x256xf32, #tpu.memory_space<vmem>>, vector<1x4x16xf32>
    %186 = vector.shape_cast %185 : vector<1x4x16xf32> to vector<4x16xf32>
    %187 = arith.addf %184, %186 : vector<4x16xf32>
    %cst_209 = arith.constant 0.000000e+00 : f32
    %188 = vector.broadcast %cst_209 : f32 to vector<4x16xf32>
    %189 = arith.maximumf %187, %188 : vector<4x16xf32>
    %c0_210 = arith.constant 0 : index
    %c0_211 = arith.constant 0 : index
    %c64_212 = arith.constant 64 : index
    %190 = vector.load %arg4[%c0_210, %c0_211, %c64_212] : memref<1x4x256xf32, #tpu.memory_space<vmem>>, vector<1x4x16xf32>
    %191 = vector.shape_cast %190 : vector<1x4x16xf32> to vector<4x16xf32>
    %192 = vector.shape_cast %189 : vector<4x16xf32> to vector<1x4x16xf32>
    tpu.vector_store %arg4[%c0_210, %c0_211, %c64_212], %192 {strides = array<i32>} : memref<1x4x256xf32, #tpu.memory_space<vmem>>, vector<1x4x16xf32>,
    %193 = vector.extract_strided_slice %147 {offsets = [0, 85], sizes = [4, 16], strides = [1, 1]} : vector<4x271xf32> to vector<4x16xf32>
    %c0_213 = arith.constant 0 : index
    %c0_214 = arith.constant 0 : index
    %c80_215 = arith.constant 80 : index
    %194 = vector.load %arg1[%c0_213, %c0_214, %c80_215] : memref<1x4x256xf32, #tpu.memory_space<vmem>>, vector<1x4x16xf32>
    %195 = vector.shape_cast %194 : vector<1x4x16xf32> to vector<4x16xf32>
    %196 = arith.addf %193, %195 : vector<4x16xf32>
    %cst_216 = arith.constant 0.000000e+00 : f32
    %197 = vector.broadcast %cst_216 : f32 to vector<4x16xf32>
    %198 = arith.maximumf %196, %197 : vector<4x16xf32>
    %c0_217 = arith.constant 0 : index
    %c0_218 = arith.constant 0 : index
    %c80_219 = arith.constant 80 : index
    %199 = vector.load %arg4[%c0_217, %c0_218, %c80_219] : memref<1x4x256xf32, #tpu.memory_space<vmem>>, vector<1x4x16xf32>
    %200 = vector.shape_cast %199 : vector<1x4x16xf32> to vector<4x16xf32>
    %201 = vector.shape_cast %198 : vector<4x16xf32> to vector<1x4x16xf32>
    tpu.vector_store %arg4[%c0_217, %c0_218, %c80_219], %201 {strides = array<i32>} : memref<1x4x256xf32, #tpu.memory_space<vmem>>, vector<1x4x16xf32>,
    %202 = vector.extract_strided_slice %147 {offsets = [0, 102], sizes = [4, 16], strides = [1, 1]} : vector<4x271xf32> to vector<4x16xf32>
    %c0_220 = arith.constant 0 : index
    %c0_221 = arith.constant 0 : index
    %c96_222 = arith.constant 96 : index
    %203 = vector.load %arg1[%c0_220, %c0_221, %c96_222] : memref<1x4x256xf32, #tpu.memory_space<vmem>>, vector<1x4x16xf32>
    %204 = vector.shape_cast %203 : vector<1x4x16xf32> to vector<4x16xf32>
    %205 = arith.addf %202, %204 : vector<4x16xf32>
    %cst_223 = arith.constant 0.000000e+00 : f32
    %206 = vector.broadcast %cst_223 : f32 to vector<4x16xf32>
    %207 = arith.maximumf %205, %206 : vector<4x16xf32>
    %c0_224 = arith.constant 0 : index
    %c0_225 = arith.constant 0 : index
    %c96_226 = arith.constant 96 : index
    %208 = vector.load %arg4[%c0_224, %c0_225, %c96_226] : memref<1x4x256xf32, #tpu.memory_space<vmem>>, vector<1x4x16xf32>
    %209 = vector.shape_cast %208 : vector<1x4x16xf32> to vector<4x16xf32>
    %210 = vector.shape_cast %207 : vector<4x16xf32> to vector<1x4x16xf32>
    tpu.vector_store %arg4[%c0_224, %c0_225, %c96_226], %210 {strides = array<i32>} : memref<1x4x256xf32, #tpu.memory_space<vmem>>, vector<1x4x16xf32>,
    %211 = vector.extract_strided_slice %147 {offsets = [0, 119], sizes = [4, 16], strides = [1, 1]} : vector<4x271xf32> to vector<4x16xf32>
    %c0_227 = arith.constant 0 : index
    %c0_228 = arith.constant 0 : index
    %c112_229 = arith.constant 112 : index
    %212 = vector.load %arg1[%c0_227, %c0_228, %c112_229] : memref<1x4x256xf32, #tpu.memory_space<vmem>>, vector<1x4x16xf32>
    %213 = vector.shape_cast %212 : vector<1x4x16xf32> to vector<4x16xf32>
    %214 = arith.addf %211, %213 : vector<4x16xf32>
    %cst_230 = arith.constant 0.000000e+00 : f32
    %215 = vector.broadcast %cst_230 : f32 to vector<4x16xf32>
    %216 = arith.maximumf %214, %215 : vector<4x16xf32>
    %c0_231 = arith.constant 0 : index
    %c0_232 = arith.constant 0 : index
    %c112_233 = arith.constant 112 : index
    %217 = vector.load %arg4[%c0_231, %c0_232, %c112_233] : memref<1x4x256xf32, #tpu.memory_space<vmem>>, vector<1x4x16xf32>
    %218 = vector.shape_cast %217 : vector<1x4x16xf32> to vector<4x16xf32>
    %219 = vector.shape_cast %216 : vector<4x16xf32> to vector<1x4x16xf32>
    tpu.vector_store %arg4[%c0_231, %c0_232, %c112_233], %219 {strides = array<i32>} : memref<1x4x256xf32, #tpu.memory_space<vmem>>, vector<1x4x16xf32>,
    %220 = vector.extract_strided_slice %147 {offsets = [0, 136], sizes = [4, 16], strides = [1, 1]} : vector<4x271xf32> to vector<4x16xf32>
    %c0_234 = arith.constant 0 : index
    %c0_235 = arith.constant 0 : index
    %c128_236 = arith.constant 128 : index
    %221 = vector.load %arg1[%c0_234, %c0_235, %c128_236] : memref<1x4x256xf32, #tpu.memory_space<vmem>>, vector<1x4x16xf32>
    %222 = vector.shape_cast %221 : vector<1x4x16xf32> to vector<4x16xf32>
    %223 = arith.addf %220, %222 : vector<4x16xf32>
    %cst_237 = arith.constant 0.000000e+00 : f32
    %224 = vector.broadcast %cst_237 : f32 to vector<4x16xf32>
    %225 = arith.maximumf %223, %224 : vector<4x16xf32>
    %c0_238 = arith.constant 0 : index
    %c0_239 = arith.constant 0 : index
    %c128_240 = arith.constant 128 : index
    %226 = vector.load %arg4[%c0_238, %c0_239, %c128_240] : memref<1x4x256xf32, #tpu.memory_space<vmem>>, vector<1x4x16xf32>
    %227 = vector.shape_cast %226 : vector<1x4x16xf32> to vector<4x16xf32>
    %228 = vector.shape_cast %225 : vector<4x16xf32> to vector<1x4x16xf32>
    tpu.vector_store %arg4[%c0_238, %c0_239, %c128_240], %228 {strides = array<i32>} : memref<1x4x256xf32, #tpu.memory_space<vmem>>, vector<1x4x16xf32>,
    %229 = vector.extract_strided_slice %147 {offsets = [0, 153], sizes = [4, 16], strides = [1, 1]} : vector<4x271xf32> to vector<4x16xf32>
    %c0_241 = arith.constant 0 : index
    %c0_242 = arith.constant 0 : index
    %c144_243 = arith.constant 144 : index
    %230 = vector.load %arg1[%c0_241, %c0_242, %c144_243] : memref<1x4x256xf32, #tpu.memory_space<vmem>>, vector<1x4x16xf32>
    %231 = vector.shape_cast %230 : vector<1x4x16xf32> to vector<4x16xf32>
    %232 = arith.addf %229, %231 : vector<4x16xf32>
    %cst_244 = arith.constant 0.000000e+00 : f32
    %233 = vector.broadcast %cst_244 : f32 to vector<4x16xf32>
    %234 = arith.maximumf %232, %233 : vector<4x16xf32>
    %c0_245 = arith.constant 0 : index
    %c0_246 = arith.constant 0 : index
    %c144_247 = arith.constant 144 : index
    %235 = vector.load %arg4[%c0_245, %c0_246, %c144_247] : memref<1x4x256xf32, #tpu.memory_space<vmem>>, vector<1x4x16xf32>
    %236 = vector.shape_cast %235 : vector<1x4x16xf32> to vector<4x16xf32>
    %237 = vector.shape_cast %234 : vector<4x16xf32> to vector<1x4x16xf32>
    tpu.vector_store %arg4[%c0_245, %c0_246, %c144_247], %237 {strides = array<i32>} : memref<1x4x256xf32, #tpu.memory_space<vmem>>, vector<1x4x16xf32>,
    %238 = vector.extract_strided_slice %147 {offsets = [0, 170], sizes = [4, 16], strides = [1, 1]} : vector<4x271xf32> to vector<4x16xf32>
    %c0_248 = arith.constant 0 : index
    %c0_249 = arith.constant 0 : index
    %c160_250 = arith.constant 160 : index
    %239 = vector.load %arg1[%c0_248, %c0_249, %c160_250] : memref<1x4x256xf32, #tpu.memory_space<vmem>>, vector<1x4x16xf32>
    %240 = vector.shape_cast %239 : vector<1x4x16xf32> to vector<4x16xf32>
    %241 = arith.addf %238, %240 : vector<4x16xf32>
    %cst_251 = arith.constant 0.000000e+00 : f32
    %242 = vector.broadcast %cst_251 : f32 to vector<4x16xf32>
    %243 = arith.maximumf %241, %242 : vector<4x16xf32>
    %c0_252 = arith.constant 0 : index
    %c0_253 = arith.constant 0 : index
    %c160_254 = arith.constant 160 : index
    %244 = vector.load %arg4[%c0_252, %c0_253, %c160_254] : memref<1x4x256xf32, #tpu.memory_space<vmem>>, vector<1x4x16xf32>
    %245 = vector.shape_cast %244 : vector<1x4x16xf32> to vector<4x16xf32>
    %246 = vector.shape_cast %243 : vector<4x16xf32> to vector<1x4x16xf32>
    tpu.vector_store %arg4[%c0_252, %c0_253, %c160_254], %246 {strides = array<i32>} : memref<1x4x256xf32, #tpu.memory_space<vmem>>, vector<1x4x16xf32>,
    %247 = vector.extract_strided_slice %147 {offsets = [0, 187], sizes = [4, 16], strides = [1, 1]} : vector<4x271xf32> to vector<4x16xf32>
    %c0_255 = arith.constant 0 : index
    %c0_256 = arith.constant 0 : index
    %c176_257 = arith.constant 176 : index
    %248 = vector.load %arg1[%c0_255, %c0_256, %c176_257] : memref<1x4x256xf32, #tpu.memory_space<vmem>>, vector<1x4x16xf32>
    %249 = vector.shape_cast %248 : vector<1x4x16xf32> to vector<4x16xf32>
    %250 = arith.addf %247, %249 : vector<4x16xf32>
    %cst_258 = arith.constant 0.000000e+00 : f32
    %251 = vector.broadcast %cst_258 : f32 to vector<4x16xf32>
    %252 = arith.maximumf %250, %251 : vector<4x16xf32>
    %c0_259 = arith.constant 0 : index
    %c0_260 = arith.constant 0 : index
    %c176_261 = arith.constant 176 : index
    %253 = vector.load %arg4[%c0_259, %c0_260, %c176_261] : memref<1x4x256xf32, #tpu.memory_space<vmem>>, vector<1x4x16xf32>
    %254 = vector.shape_cast %253 : vector<1x4x16xf32> to vector<4x16xf32>
    %255 = vector.shape_cast %252 : vector<4x16xf32> to vector<1x4x16xf32>
    tpu.vector_store %arg4[%c0_259, %c0_260, %c176_261], %255 {strides = array<i32>} : memref<1x4x256xf32, #tpu.memory_space<vmem>>, vector<1x4x16xf32>,
    %256 = vector.extract_strided_slice %147 {offsets = [0, 204], sizes = [4, 16], strides = [1, 1]} : vector<4x271xf32> to vector<4x16xf32>
    %c0_262 = arith.constant 0 : index
    %c0_263 = arith.constant 0 : index
    %c192_264 = arith.constant 192 : index
    %257 = vector.load %arg1[%c0_262, %c0_263, %c192_264] : memref<1x4x256xf32, #tpu.memory_space<vmem>>, vector<1x4x16xf32>
    %258 = vector.shape_cast %257 : vector<1x4x16xf32> to vector<4x16xf32>
    %259 = arith.addf %256, %258 : vector<4x16xf32>
    %cst_265 = arith.constant 0.000000e+00 : f32
    %260 = vector.broadcast %cst_265 : f32 to vector<4x16xf32>
    %261 = arith.maximumf %259, %260 : vector<4x16xf32>
    %c0_266 = arith.constant 0 : index
    %c0_267 = arith.constant 0 : index
    %c192_268 = arith.constant 192 : index
    %262 = vector.load %arg4[%c0_266, %c0_267, %c192_268] : memref<1x4x256xf32, #tpu.memory_space<vmem>>, vector<1x4x16xf32>
    %263 = vector.shape_cast %262 : vector<1x4x16xf32> to vector<4x16xf32>
    %264 = vector.shape_cast %261 : vector<4x16xf32> to vector<1x4x16xf32>
    tpu.vector_store %arg4[%c0_266, %c0_267, %c192_268], %264 {strides = array<i32>} : memref<1x4x256xf32, #tpu.memory_space<vmem>>, vector<1x4x16xf32>,
    %265 = vector.extract_strided_slice %147 {offsets = [0, 221], sizes = [4, 16], strides = [1, 1]} : vector<4x271xf32> to vector<4x16xf32>
    %c0_269 = arith.constant 0 : index
    %c0_270 = arith.constant 0 : index
    %c208_271 = arith.constant 208 : index
    %266 = vector.load %arg1[%c0_269, %c0_270, %c208_271] : memref<1x4x256xf32, #tpu.memory_space<vmem>>, vector<1x4x16xf32>
    %267 = vector.shape_cast %266 : vector<1x4x16xf32> to vector<4x16xf32>
    %268 = arith.addf %265, %267 : vector<4x16xf32>
    %cst_272 = arith.constant 0.000000e+00 : f32
    %269 = vector.broadcast %cst_272 : f32 to vector<4x16xf32>
    %270 = arith.maximumf %268, %269 : vector<4x16xf32>
    %c0_273 = arith.constant 0 : index
    %c0_274 = arith.constant 0 : index
    %c208_275 = arith.constant 208 : index
    %271 = vector.load %arg4[%c0_273, %c0_274, %c208_275] : memref<1x4x256xf32, #tpu.memory_space<vmem>>, vector<1x4x16xf32>
    %272 = vector.shape_cast %271 : vector<1x4x16xf32> to vector<4x16xf32>
    %273 = vector.shape_cast %270 : vector<4x16xf32> to vector<1x4x16xf32>
    tpu.vector_store %arg4[%c0_273, %c0_274, %c208_275], %273 {strides = array<i32>} : memref<1x4x256xf32, #tpu.memory_space<vmem>>, vector<1x4x16xf32>,
    %274 = vector.extract_strided_slice %147 {offsets = [0, 238], sizes = [4, 16], strides = [1, 1]} : vector<4x271xf32> to vector<4x16xf32>
    %c0_276 = arith.constant 0 : index
    %c0_277 = arith.constant 0 : index
    %c224_278 = arith.constant 224 : index
    %275 = vector.load %arg1[%c0_276, %c0_277, %c224_278] : memref<1x4x256xf32, #tpu.memory_space<vmem>>, vector<1x4x16xf32>
    %276 = vector.shape_cast %275 : vector<1x4x16xf32> to vector<4x16xf32>
    %277 = arith.addf %274, %276 : vector<4x16xf32>
    %cst_279 = arith.constant 0.000000e+00 : f32
    %278 = vector.broadcast %cst_279 : f32 to vector<4x16xf32>
    %279 = arith.maximumf %277, %278 : vector<4x16xf32>
    %c0_280 = arith.constant 0 : index
    %c0_281 = arith.constant 0 : index
    %c224_282 = arith.constant 224 : index
    %280 = vector.load %arg4[%c0_280, %c0_281, %c224_282] : memref<1x4x256xf32, #tpu.memory_space<vmem>>, vector<1x4x16xf32>
    %281 = vector.shape_cast %280 : vector<1x4x16xf32> to vector<4x16xf32>
    %282 = vector.shape_cast %279 : vector<4x16xf32> to vector<1x4x16xf32>
    tpu.vector_store %arg4[%c0_280, %c0_281, %c224_282], %282 {strides = array<i32>} : memref<1x4x256xf32, #tpu.memory_space<vmem>>, vector<1x4x16xf32>,
    %283 = vector.extract_strided_slice %147 {offsets = [0, 255], sizes = [4, 16], strides = [1, 1]} : vector<4x271xf32> to vector<4x16xf32>
    %c0_283 = arith.constant 0 : index
    %c0_284 = arith.constant 0 : index
    %c240_285 = arith.constant 240 : index
    %284 = vector.load %arg1[%c0_283, %c0_284, %c240_285] : memref<1x4x256xf32, #tpu.memory_space<vmem>>, vector<1x4x16xf32>
    %285 = vector.shape_cast %284 : vector<1x4x16xf32> to vector<4x16xf32>
    %286 = arith.addf %283, %285 : vector<4x16xf32>
    %cst_286 = arith.constant 0.000000e+00 : f32
    %287 = vector.broadcast %cst_286 : f32 to vector<4x16xf32>
    %288 = arith.maximumf %286, %287 : vector<4x16xf32>
    %c0_287 = arith.constant 0 : index
    %c0_288 = arith.constant 0 : index
    %c240_289 = arith.constant 240 : index
    %289 = vector.load %arg4[%c0_287, %c0_288, %c240_289] : memref<1x4x256xf32, #tpu.memory_space<vmem>>, vector<1x4x16xf32>
    %290 = vector.shape_cast %289 : vector<1x4x16xf32> to vector<4x16xf32>
    %291 = vector.shape_cast %288 : vector<4x16xf32> to vector<1x4x16xf32>
    tpu.vector_store %arg4[%c0_287, %c0_288, %c240_289], %291 {strides = array<i32>} : memref<1x4x256xf32, #tpu.memory_space<vmem>>, vector<1x4x16xf32>,
    return
  }
  func.func @transform_0(%arg0: i32) -> (i32, i32, i32) {
    %c0_i32 = arith.constant 0 : i32
    %c0_i32_0 = arith.constant 0 : i32
    %c0_i32_1 = arith.constant 0 : i32
    return %arg0, %c0_i32, %c0_i32_0 : i32, i32, i32
  }
  func.func @transform_1(%arg0: i32) -> (i32, i32) {
    %c0_i32 = arith.constant 0 : i32
    %c0_i32_0 = arith.constant 0 : i32
    %c0_i32_1 = arith.constant 0 : i32
    return %c0_i32, %c0_i32_0 : i32, i32
  }
  func.func @transform_2(%arg0: i32) -> (i32, i32) {
    %c0_i32 = arith.constant 0 : i32
    %c0_i32_0 = arith.constant 0 : i32
    %c0_i32_1 = arith.constant 0 : i32
    return %c0_i32, %c0_i32_0 : i32, i32
  }
  func.func @transform_3(%arg0: i32) -> (i32, i32, i32) {
    %c0_i32 = arith.constant 0 : i32
    %c0_i32_0 = arith.constant 0 : i32
    %c0_i32_1 = arith.constant 0 : i32
    return %arg0, %c0_i32, %c0_i32_0 : i32, i32, i32
  }
}

</mosaic_0001>

<llo_original>
// kernel: tpu_custom_call.1
$region0: #{tpu_custom_call.1}
  #allocation0 [shape = 'u32[]', space=smem, size = 0x4, offset = 0x4, fixed_abs, tag = 'smem constant byte address 0x4 - core index']
  #allocation1 [shape = 'u32[144,128]{1,0:T(1,128)}', space=vmem, size = 0x12000, scoped, tag = 'internal scratch']
  #allocation2 [shape = 'bf16[4,384]{1,0:T(4,128)(2,1)}', space=vmem, size = 0xc00, scoped, tag = 'scratch operand']
  #allocation3 [shape = 'bf16[4,384]{1,0:T(4,128)(2,1)}', space=vmem, size = 0xc00, scoped, tag = 'scratch operand']
  #allocation4 [shape = 'bf16[36,271]{1,0:T(8,128)(2,1)}', space=vmem, size = 0x7800, scoped, tag = 'scratch operand']
  %s0 = inlined_call_operand.hbm [shape: f32[2,4,256], index: 0, kind: input, shape index: {}]
  %s1 = inlined_call_operand.hbm [shape: bf16[4,36], index: 1, kind: input, shape index: {}]
  %s2 = inlined_call_operand.hbm [shape: bf16[4,36], index: 2, kind: input, shape index: {}]
  %s3 = inlined_call_operand.hbm [shape: f32[2,4,256], index: 3, kind: output, shape index: {}]
  %s4 = sld [smem:[#allocation0]]
  $region57: #{tpu_custom_call.1} parent=0
    _
  %s6 = ssub.s32 1, %s4
  %s7 = scalar_select 0, %s6, %s4
  $region1: #{tpu_custom_call.1} parent=0
    #allocation5 [shape = 'u8[8192]{0}', space=vmem, size = 0x2000, scoped, tag = 'input window, operand 0']
    #allocation6 [shape = 's32[2]{0}', space=sflag, size = 0x8, scoped, tag = 'scoped memory for tpu_custom_call.1']
    #allocation7 [shape = 's32[2]{0}', space=sflag, size = 0x8, scoped, tag = 'scoped memory for tpu_custom_call.1']
    #allocation8 [shape = 'u8[1024]{0}', space=vmem, size = 0x400, scoped, tag = 'input window, operand 1, single buffered']
    #allocation9 [shape = 's32[1]{0}', space=sflag, size = 0x4, scoped, tag = 'scoped memory for tpu_custom_call.1']
    #allocation10 [shape = 'u8[1024]{0}', space=vmem, size = 0x400, scoped, tag = 'input window, operand 2, single buffered']
    #allocation11 [shape = 'u8[8192]{0}', space=vmem, size = 0x2000, scoped, tag = 'output window, operand 0']
    %8 = vsyncpa [#allocation6], 0
    %s9 = scalar_lea.sflag [#allocation6], 1
    %10 = vsyncpa %s9, 0
    %11 = vsyncpa [#allocation9], 0
    %12 = vsyncpa [#allocation7], 0
    %s13 = scalar_lea.sflag [#allocation7], 1
    %14 = vsyncpa %s13, 0
    loop: start=0, step=1, limit=4
    $region2: #{tpu_custom_call.1} parent=1 // loop_pre_header
      _
    $region3: #{tpu_custom_call.1} parent=1 // loop_header
      %s16 = sphi 0, %s20
      %p17 = scmp.ge.s32.totalorder %s16, 4
      %s26 = sphi 0, %s28
      %s29 = sphi 0, %s26
      %s30 = sphi 0, %s29
      %s46 = sphi 0, %s30
      %s50 = sphi 0, %s50
      %s52 = sphi 0, %s50
      %s53 = sphi 0, %s52
      %s67 = sphi 0, %s53
      %s71 = sphi 0, %s71
      %s73 = sphi 0, %s71
      %s74 = sphi 0, %s73
      %s88 = sphi 0, %s74
      %s94 = sphi 0, %s96
      %s97 = sphi 0, %s94
      %s98 = sphi 0, %s97
      %s114 = sphi 0, %s98
    $region4: #{tpu_custom_call.1} parent=1 // loop_header_branch
      %19 = sbr.rel (%p17) target = $region8
    $region5: #{tpu_custom_call.1} parent=1 // loop_body
      %s21 = ssub.s32 %s16, 1
      %s22 = ssub.s32 %s16, 2
      %s23 = sadd.s32 %s16, 1
      %s24 = ssub.s32 %s16, %s23
      %p25 = scmp.eq.s32.totalorder %s24, 0
      %s27 = sadd.s32 %s26, 1
      %s28 = scalar_select %p25, %s26, %s27
      %p31 = pneg %p25
      %p32 = scmp.eq.s32.totalorder %s16, 1
      %p33 = por %p31, %p32
      %p34 = scmp.ne.s32.totalorder %s26, %s29
      %p35 = scmp.eq.s32.totalorder %s16, 0
      %p36 = por %p34, %p35
      %p37 = scmp.ne.s32.totalorder %s26, %s29
      %p38 = scmp.eq.s32.totalorder %s21, 1
      %p39 = por %p37, %p38
      %p40 = scmp.ne.s32.totalorder %s29, %s30
      %p41 = scmp.eq.s32.totalorder %s21, 0
      %p42 = por %p40, %p41
      %p43 = scmp.ne.s32.totalorder %s29, %s30
      %p44 = scmp.eq.s32.totalorder %s22, 1
      %p45 = por %p43, %p44
      %p47 = scmp.ne.s32.totalorder %s30, %s46
      %p48 = scmp.eq.s32.totalorder %s22, 0
      %p49 = por %p47, %p48
      %s51 = sadd.s32 %s50, 1
      %p54 = scmp.eq.s32.totalorder %s16, 1
      %p55 = scmp.ne.s32.totalorder %s50, %s52
      %p56 = scmp.eq.s32.totalorder %s16, 0
      %p57 = por %p55, %p56
      %p58 = scmp.ne.s32.totalorder %s50, %s52
      %p59 = scmp.eq.s32.totalorder %s21, 1
      %p60 = por %p58, %p59
      %p61 = scmp.ne.s32.totalorder %s52, %s53
      %p62 = scmp.eq.s32.totalorder %s21, 0
      %p63 = por %p61, %p62
      %p64 = scmp.ne.s32.totalorder %s52, %s53
      %p65 = scmp.eq.s32.totalorder %s22, 1
      %p66 = por %p64, %p65
      %p68 = scmp.ne.s32.totalorder %s53, %s67
      %p69 = scmp.eq.s32.totalorder %s22, 0
      %p70 = por %p68, %p69
      %s72 = sadd.s32 %s71, 1
      %p75 = scmp.eq.s32.totalorder %s16, 1
      %p76 = scmp.ne.s32.totalorder %s71, %s73
      %p77 = scmp.eq.s32.totalorder %s16, 0
      %p78 = por %p76, %p77
      %p79 = scmp.ne.s32.totalorder %s71, %s73
      %p80 = scmp.eq.s32.totalorder %s21, 1
      %p81 = por %p79, %p80
      %p82 = scmp.ne.s32.totalorder %s73, %s74
      %p83 = scmp.eq.s32.totalorder %s21, 0
      %p84 = por %p82, %p83
      %p85 = scmp.ne.s32.totalorder %s73, %s74
      %p86 = scmp.eq.s32.totalorder %s22, 1
      %p87 = por %p85, %p86
      %p89 = scmp.ne.s32.totalorder %s74, %s88
      %p90 = scmp.eq.s32.totalorder %s22, 0
      %p91 = por %p89, %p90
      %s92 = ssub.s32 %s16, %s23
      %p93 = scmp.eq.s32.totalorder %s92, 0
      %s95 = sadd.s32 %s94, 1
      %s96 = scalar_select %p93, %s94, %s95
      %p99 = pneg %p93
      %p100 = scmp.eq.s32.totalorder %s16, 1
      %p101 = por %p99, %p100
      %p102 = scmp.ne.s32.totalorder %s94, %s97
      %p103 = scmp.eq.s32.totalorder %s16, 0
      %p104 = por %p102, %p103
      %p105 = scmp.ne.s32.totalorder %s94, %s97
      %p106 = scmp.eq.s32.totalorder %s21, 1
      %p107 = por %p105, %p106
      %p108 = scmp.ne.s32.totalorder %s97, %s98
      %p109 = scmp.eq.s32.totalorder %s21, 0
      %p110 = por %p108, %p109
      %p111 = scmp.ne.s32.totalorder %s97, %s98
      %p112 = scmp.eq.s32.totalorder %s22, 1
      %p113 = por %p111, %p112
      %p115 = scmp.ne.s32.totalorder %s98, %s114
      %p116 = scmp.eq.s32.totalorder %s22, 0
      %p117 = por %p115, %p116
      %p118 = scmp.le.s32.totalorder 1, %s16
      %p119 = scmp.lt.s32.totalorder %s16, 3
      %p120 = pnand %p118, %p119
      %p121 = pneg %p120
      // Predicated region
      $region9: #{tpu_custom_call.1} parent=5 // pred_check
        _
      $region10: #{tpu_custom_call.1} parent=5 // pred_check_branch
        %123 = sbr.rel (%p120) target = $region12
      $region11: #{tpu_custom_call.1} parent=5 // pred_region
        %s124 = ssub.s32 %s16, 1
        // Predicated region
        $region13: #{tpu_custom_call.1} parent=11 // pred_check
          %p125 = pneg %p63
        $region14: #{tpu_custom_call.1} parent=11 // pred_check_branch
          %127 = sbr.rel (%p125) target = $region16
        $region15: #{tpu_custom_call.1} parent=11 // pred_region
          %s129 = ssub.s32 32, 32
          %130 = vsyncadd [#allocation9], %s129
          %s132 = sshll.u32 [#allocation8], 4
          %s133 = int_to_ptr.vmem [resolvable:$true] %s132
          %135 = dma.hbm_to_vmem [thread:$0]  %s1, 32, %s133, [#allocation9]
        $region16: #{tpu_custom_call.1} parent=11 // pred_fallthru
          _
        // Predicated region
        $region17: #{tpu_custom_call.1} parent=11 // pred_check
          %p136 = pneg %p84
        $region18: #{tpu_custom_call.1} parent=11 // pred_check_branch
          %138 = sbr.rel (%p136) target = $region20
        $region19: #{tpu_custom_call.1} parent=11 // pred_region
          %s140 = ssub.s32 32, 32
          %141 = vsyncadd [#allocation9], %s140
          %s143 = sshll.u32 [#allocation10], 4
          %s144 = int_to_ptr.vmem [resolvable:$true] %s143
          %146 = dma.hbm_to_vmem [thread:$0]  %s2, 32, %s144, [#allocation9]
        $region20: #{tpu_custom_call.1} parent=11 // pred_fallthru
          _
      $region12: #{tpu_custom_call.1} parent=5 // pred_fallthru
        _
      %p147 = scmp.lt.s32.totalorder %s16, 2
      // Predicated region
      $region21: #{tpu_custom_call.1} parent=5 // pred_check
        %p148 = pneg %p147
      $region22: #{tpu_custom_call.1} parent=5 // pred_check_branch
        %150 = sbr.rel (%p148) target = $region24
      $region23: #{tpu_custom_call.1} parent=5 // pred_region
        // Predicated region
        $region25: #{tpu_custom_call.1} parent=23 // pred_check
          %p151 = pneg %p36
        $region26: #{tpu_custom_call.1} parent=23 // pred_check_branch
          %153 = sbr.rel (%p151) target = $region28
        $region27: #{tpu_custom_call.1} parent=23 // pred_region
          %s154 = sand.u32 %s26, 1
          %s155 = scalar_lea.sflag [#allocation6], %s154
          %s156 = sand.u32 %s26, 1
          %s157 = smul.addr %s156, 8
          %s158 = scalar_lea.vmem [#allocation5], %s157
          %s160 = ssub.s32 128, 128
          %161 = vsyncadd %s155, %s160
          %s162 = smul.addr %s16, 2
          %s163 = smul.addr %s162, 64
          %s164 = scalar_lea.hbm %s0, %s163
          %s166 = sshll.u32 %s158, 4
          %s167 = int_to_ptr.vmem [resolvable:$true] %s166
          %169 = dma.hbm_to_vmem [thread:$0]  %s164, 128, %s167, %s155
        $region28: #{tpu_custom_call.1} parent=23 // pred_fallthru
          _
      $region24: #{tpu_custom_call.1} parent=5 // pred_fallthru
        _
      %p170 = scmp.le.s32.totalorder 1, %s16
      %p171 = scmp.lt.s32.totalorder %s16, 3
      %p172 = pnand %p170, %p171
      %p173 = pneg %p172
      // Predicated region
      $region29: #{tpu_custom_call.1} parent=5 // pred_check
        _
      $region30: #{tpu_custom_call.1} parent=5 // pred_check_branch
        %175 = sbr.rel (%p172) target = $region32
      $region31: #{tpu_custom_call.1} parent=5 // pred_region
        %s176 = ssub.s32 %s16, 1
        %s177 = sand.u32 %s29, 1
        %s178 = scalar_lea.sflag [#allocation6], %s177
        %s179 = sand.u32 %s29, 1
        %s180 = smul.addr %s179, 8
        %s181 = scalar_lea.vmem [#allocation5], %s180
        // Predicated region
        $region33: #{tpu_custom_call.1} parent=31 // pred_check
          %p182 = pneg %p42
        $region34: #{tpu_custom_call.1} parent=31 // pred_check_branch
          %184 = sbr.rel (%p182) target = $region36
        $region35: #{tpu_custom_call.1} parent=31 // pred_region
          %185 = dma.done %s178, 128
        $region36: #{tpu_custom_call.1} parent=31 // pred_fallthru
          _
        // Predicated region
        $region37: #{tpu_custom_call.1} parent=31 // pred_check
          %p186 = pneg %p63
        $region38: #{tpu_custom_call.1} parent=31 // pred_check_branch
          %188 = sbr.rel (%p186) target = $region40
        $region39: #{tpu_custom_call.1} parent=31 // pred_region
          %189 = dma.done [#allocation9], 32
        $region40: #{tpu_custom_call.1} parent=31 // pred_fallthru
          _
        // Predicated region
        $region41: #{tpu_custom_call.1} parent=31 // pred_check
          %p190 = pneg %p84
        $region42: #{tpu_custom_call.1} parent=31 // pred_check_branch
          %192 = sbr.rel (%p190) target = $region44
        $region43: #{tpu_custom_call.1} parent=31 // pred_region
          %193 = dma.done [#allocation9], 32
        $region44: #{tpu_custom_call.1} parent=31 // pred_fallthru
          _
        %s194 = sand.u32 %s29, 1
        %s195 = scalar_lea.sflag [#allocation6], %s194
        %s196 = sand.u32 %s29, 1
        %s197 = smul.addr %s196, 8
        %s198 = scalar_lea.vmem [#allocation5], %s197
        %p199 = pneg %p42
        %p200 = pneg %p39
        %p201 = pneg %p63
        %p202 = pneg %p60
        %p203 = pneg %p84
        %p204 = pneg %p81
        %p205 = pneg %p110
        %p206 = pneg %p107
        %s207 = sand.u32 %s97, 1
        %s208 = scalar_lea.sflag [#allocation7], %s207
        %s209 = sand.u32 %s97, 1
        %s210 = smul.addr %s209, 8
        %s211 = scalar_lea.vmem [#allocation11], %s210
        %vm213 = vcmask 140288
        %214 = vst.msk [vmem:[#allocation2] sm:$0x3] %vm213, 0
        %vm215 = vcmask 1041672
        %216 = vst.msk [vmem:[#allocation2 + $0x4] sm:$0x3] %vm215, 0
        %v217 = vld [vmem:[%s181] sm:$0xf]
        %v218 = vpack.c.bf16 %v217, %v217
        %v221 = vunpack.c.l.s4 1983009808
        %v222 = vunpack.c.0.s8 %v221
        %v223 = vlaneseq
        %v224 = vshrl.u32 %v223, 7
        %v225 = vsub.s32 %v222, %v224
        %v226 = vrot.slane %v218, %v225
        %227 = vrot.lane.b32.xlu0 %v226, 18
        %v228 = vpop.permute.xlu0 %227
        %vm230 = vcmask 271504
        %231 = vst.msk [vmem:[#allocation2] sm:$0x3] %vm230, %v228
        %vm232 = vcmask 279824
        %233 = vst.msk [vmem:[#allocation2] sm:$0x3] %vm232, 0
        %v234 = vld [vmem:[%s181] sm:$0xf]
        %v235 = vpack.c.bf16 %v234, %v234
        %v238 = vunpack.c.l.s4 1983009808
        %v239 = vunpack.c.0.s8 %v238
        %v240 = vlaneseq
        %v241 = vshrl.u32 %v240, 7
        %v242 = vsub.s32 %v239, %v241
        %v243 = vrot.slane %v235, %v242
        %244 = vrot.lane.b32.xlu0 %v243, 19
        %v245 = vpop.permute.xlu0 %244
        %vm247 = vcmask 410904
        %248 = vst.msk [vmem:[#allocation2] sm:$0x3] %vm247, %v245
        %vm249 = vcmask 419224
        %250 = vst.msk [vmem:[#allocation2] sm:$0x3] %vm249, 0
        %v251 = vld [vmem:[%s181] sm:$0xf]
        %v252 = vpack.c.bf16 %v251, %v251
        %v255 = vunpack.c.l.s4 1983009808
        %v256 = vunpack.c.0.s8 %v255
        %v257 = vlaneseq
        %v258 = vshrl.u32 %v257, 7
        %v259 = vsub.s32 %v256, %v258
        %v260 = vrot.slane %v252, %v259
        %261 = vrot.lane.b32.xlu0 %v260, 20
        %v262 = vpop.permute.xlu0 %261
        %vm264 = vcmask 550304
        %265 = vst.msk [vmem:[#allocation2] sm:$0x3] %vm264, %v262
        %vm266 = vcmask 558624
        %267 = vst.msk [vmem:[#allocation2] sm:$0x3] %vm266, 0
        %v268 = vld [vmem:[%s181] sm:$0xf]
        %v269 = vpack.c.bf16 %v268, %v268
        %v272 = vunpack.c.l.s4 1983009808
        %v273 = vunpack.c.0.s8 %v272
        %v274 = vlaneseq
        %v275 = vshrl.u32 %v274, 7
        %v276 = vsub.s32 %v273, %v275
        %v277 = vrot.slane %v269, %v276
        %278 = vrot.lane.b32.xlu0 %v277, 21
        %v279 = vpop.permute.xlu0 %278
        %vm281 = vcmask 689704
        %282 = vst.msk [vmem:[#allocation2] sm:$0x3] %vm281, %v279
        %vm283 = vcmask 698024
        %284 = vst.msk [vmem:[#allocation2] sm:$0x3] %vm283, 0
        %v285 = vld [vmem:[%s181] sm:$0xf]
        %v286 = vpack.c.bf16 %v285, %v285
        %v289 = vunpack.c.l.s4 1983009808
        %v290 = vunpack.c.0.s8 %v289
        %v291 = vlaneseq
        %v292 = vshrl.u32 %v291, 7
        %v293 = vsub.s32 %v290, %v292
        %v294 = vrot.slane %v286, %v293
        %295 = vrot.lane.b32.xlu0 %v294, 22
        %v296 = vpop.permute.xlu0 %295
        %vm298 = vcmask 829104
        %299 = vst.msk [vmem:[#allocation2] sm:$0x3] %vm298, %v296
        %vm300 = vcmask 837424
        %301 = vst.msk [vmem:[#allocation2] sm:$0x3] %vm300, 0
        %v302 = vld [vmem:[%s181] sm:$0xf]
        %v303 = vpack.c.bf16 %v302, %v302
        %v306 = vunpack.c.l.s4 1983009808
        %v307 = vunpack.c.0.s8 %v306
        %v308 = vlaneseq
        %v309 = vshrl.u32 %v308, 7
        %v310 = vsub.s32 %v307, %v309
        %v311 = vrot.slane %v303, %v310
        %312 = vrot.lane.b32.xlu0 %v311, 23
        %v313 = vpop.permute.xlu0 %312
        %vm315 = vcmask 968504
        %316 = vst.msk [vmem:[#allocation2] sm:$0x3] %vm315, %v313
        %vm317 = vcmask 976824
        %318 = vst.msk [vmem:[#allocation2] sm:$0x3] %vm317, 0
        %v319 = vld [vmem:[%s181] sm:$0xf]
        %v320 = vpack.c.bf16 %v319, %v319
        %v323 = vunpack.c.l.s4 1983009808
        %v324 = vunpack.c.0.s8 %v323
        %v325 = vlaneseq
        %v326 = vshrl.u32 %v325, 7
        %v327 = vsub.s32 %v324, %v326
        %v328 = vrot.slane %v320, %v327
        %329 = vrot.lane.b32.xlu0 %v328, 24
        %v330 = vpop.permute.xlu0 %329
        %v331 = vrot.slane %v330, 6
        %vm332 = vcmask 195584
        %v333 = vsel %vm332, %v331, %v330
        %vm335 = vcmask 1042368
        %vm336 = vcmask 60418
        %vm337 = vmor %vm336, %vm335
        %338 = vst.msk [vmem:[#allocation2] sm:$0xf] %vm337, %v333
        %vm339 = vcmask 66624
        %340 = vst.msk [vmem:[#allocation2 + $0x2] sm:$0x3] %vm339, 0
        %v341 = vld [vmem:[%s181] sm:$0xf]
        %v342 = vpack.c.bf16 %v341, %v341
        %v345 = vunpack.c.l.s4 1983009808
        %v346 = vunpack.c.0.s8 %v345
        %v347 = vlaneseq
        %v348 = vshrl.u32 %v347, 7
        %v349 = vsub.s32 %v346, %v348
        %v350 = vrot.slane %v342, %v349
        %351 = vrot.lane.b32.xlu0 %v350, 25
        %v352 = vpop.permute.xlu0 %351
        %vm354 = vcmask 197704
        %355 = vst.msk [vmem:[#allocation2 + $0x2] sm:$0x3] %vm354, %v352
        %vm356 = vcmask 206024
        %357 = vst.msk [vmem:[#allocation2 + $0x2] sm:$0x3] %vm356, 0
        %v358 = vld [vmem:[%s181 + $0x4] sm:$0xf]
        %v359 = vpack.c.bf16 %v358, %v358
        %v362 = vunpack.c.l.s4 1983009808
        %v363 = vunpack.c.0.s8 %v362
        %v364 = vlaneseq
        %v365 = vshrl.u32 %v364, 7
        %v366 = vsub.s32 %v363, %v365
        %v367 = vrot.slane %v359, %v366
        %368 = vrot.lane.b32.xlu0 %v367, 26
        %v369 = vpop.permute.xlu0 %368
        %vm371 = vcmask 337104
        %372 = vst.msk [vmem:[#allocation2 + $0x2] sm:$0x3] %vm371, %v369
        %vm373 = vcmask 345424
        %374 = vst.msk [vmem:[#allocation2 + $0x2] sm:$0x3] %vm373, 0
        %v375 = vld [vmem:[%s181 + $0x4] sm:$0xf]
        %v376 = vpack.c.bf16 %v375, %v375
        %v379 = vunpack.c.l.s4 1983009808
        %v380 = vunpack.c.0.s8 %v379
        %v381 = vlaneseq
        %v382 = vshrl.u32 %v381, 7
        %v383 = vsub.s32 %v380, %v382
        %v384 = vrot.slane %v376, %v383
        %385 = vrot.lane.b32.xlu0 %v384, 27
        %v386 = vpop.permute.xlu0 %385
        %vm388 = vcmask 476504
        %389 = vst.msk [vmem:[#allocation2 + $0x2] sm:$0x3] %vm388, %v386
        %vm390 = vcmask 484824
        %391 = vst.msk [vmem:[#allocation2 + $0x2] sm:$0x3] %vm390, 0
        %v392 = vld [vmem:[%s181 + $0x4] sm:$0xf]
        %v393 = vpack.c.bf16 %v392, %v392
        %v396 = vunpack.c.l.s4 1983009808
        %v397 = vunpack.c.0.s8 %v396
        %v398 = vlaneseq
        %v399 = vshrl.u32 %v398, 7
        %v400 = vsub.s32 %v397, %v399
        %v401 = vrot.slane %v393, %v400
        %402 = vrot.lane.b32.xlu0 %v401, 28
        %v403 = vpop.permute.xlu0 %402
        %vm405 = vcmask 615904
        %406 = vst.msk [vmem:[#allocation2 + $0x2] sm:$0x3] %vm405, %v403
        %vm407 = vcmask 624224
        %408 = vst.msk [vmem:[#allocation2 + $0x2] sm:$0x3] %vm407, 0
        %v409 = vld [vmem:[%s181 + $0x4] sm:$0xf]
        %v410 = vpack.c.bf16 %v409, %v409
        %v413 = vunpack.c.l.s4 1983009808
        %v414 = vunpack.c.0.s8 %v413
        %v415 = vlaneseq
        %v416 = vshrl.u32 %v415, 7
        %v417 = vsub.s32 %v414, %v416
        %v418 = vrot.slane %v410, %v417
        %419 = vrot.lane.b32.xlu0 %v418, 29
        %v420 = vpop.permute.xlu0 %419
        %vm422 = vcmask 755304
        %423 = vst.msk [vmem:[#allocation2 + $0x2] sm:$0x3] %vm422, %v420
        %vm424 = vcmask 763624
        %425 = vst.msk [vmem:[#allocation2 + $0x2] sm:$0x3] %vm424, 0
        %v426 = vld [vmem:[%s181 + $0x4] sm:$0xf]
        %v427 = vpack.c.bf16 %v426, %v426
        %v430 = vunpack.c.l.s4 1983009808
        %v431 = vunpack.c.0.s8 %v430
        %v432 = vlaneseq
        %v433 = vshrl.u32 %v432, 7
        %v434 = vsub.s32 %v431, %v433
        %v435 = vrot.slane %v427, %v434
        %436 = vrot.lane.b32.xlu0 %v435, 30
        %v437 = vpop.permute.xlu0 %436
        %vm439 = vcmask 894704
        %440 = vst.msk [vmem:[#allocation2 + $0x2] sm:$0x3] %vm439, %v437
        %vm441 = vcmask 903024
        %442 = vst.msk [vmem:[#allocation2 + $0x2] sm:$0x3] %vm441, 0
        %v443 = vld [vmem:[%s181 + $0x4] sm:$0xf]
        %v444 = vpack.c.bf16 %v443, %v443
        %v447 = vunpack.c.l.s4 1983009808
        %v448 = vunpack.c.0.s8 %v447
        %v449 = vlaneseq
        %v450 = vshrl.u32 %v449, 7
        %v451 = vsub.s32 %v448, %v450
        %v452 = vrot.slane %v444, %v451
        %453 = vrot.lane.b32.xlu0 %v452, 31
        %v454 = vpop.permute.xlu0 %453
        %vm456 = vcmask 1034104
        %457 = vst.msk [vmem:[#allocation2 + $0x2] sm:$0x3] %vm456, %v454
        %vm458 = vcmask 1042424
        %459 = vst.msk [vmem:[#allocation2 + $0x2] sm:$0x3] %vm458, 0
        %v460 = vld [vmem:[%s181 + $0x4] sm:$0xf]
        %v461 = vpack.c.bf16 %v460, %v460
        %v464 = vunpack.c.l.s4 1983009808
        %v465 = vunpack.c.0.s8 %v464
        %v466 = vlaneseq
        %v467 = vshrl.u32 %v466, 7
        %v468 = vsub.s32 %v465, %v467
        %v469 = vrot.slane %v461, %v468
        %470 = vrot.lane.b32.xlu0 %v469, 32
        %v471 = vpop.permute.xlu0 %470
        %vm473 = vcmask 123904
        %474 = vst.msk [vmem:[#allocation2 + $0x4] sm:$0x3] %vm473, %v471
        %vm475 = vcmask 132224
        %476 = vst.msk [vmem:[#allocation2 + $0x4] sm:$0x3] %vm475, 0
        %v477 = vld [vmem:[%s181 + $0x4] sm:$0xf]
        %v478 = vpack.c.bf16 %v477, %v477
        %v481 = vunpack.c.l.s4 1983009808
        %v482 = vunpack.c.0.s8 %v481
        %v483 = vlaneseq
        %v484 = vshrl.u32 %v483, 7
        %v485 = vsub.s32 %v482, %v484
        %v486 = vrot.slane %v478, %v485
        %487 = vrot.lane.b32.xlu0 %v486, 33
        %v488 = vpop.permute.xlu0 %487
        %vm490 = vcmask 263304
        %491 = vst.msk [vmem:[#allocation2 + $0x4] sm:$0x3] %vm490, %v488
        %vm492 = vcmask 271624
        %493 = vst.msk [vmem:[#allocation2 + $0x4] sm:$0x3] %vm492, 0
        %v494 = vld [vmem:[#allocation8] sm:$0x3]
        %v495 = vld [vmem:[#allocation10] sm:$0x3]
        %v496 = vld [vmem:[#allocation2] sm:$0x3f]
        %v498 = vcombine.high %v496, %v496
        %v500 = vunpack.c.l.s4 1983009808
        %v501 = vunpack.c.0.s8 %v500
        %v502 = vlaneseq
        %v503 = vshrl.u32 %v502, 7
        %v504 = vsub.s32 %v501, %v503
        %v505 = vrot.slane %v496, %v504
        %v507 = vunpack.c.l.s4 1983009808
        %v508 = vunpack.c.0.s8 %v507
        %v509 = vlaneseq
        %v510 = vshrl.u32 %v509, 7
        %v511 = vsub.s32 %v508, %v510
        %v512 = vrot.slane %v498, %v511
        %515 = vst [vmem:[#allocation4] sm:$0x33] %v505
        %vm516 = vcmask 115712
        %517 = vst.msk [vmem:[#allocation4 + $0x8] sm:$0x3] %vm516, %v512
        %v518 = vld [vmem:[#allocation2] sm:$0x3f]
        %v520 = vcombine.low %v518, %v518
        %v522 = vunpack.c.l.s4 1983009808
        %v523 = vunpack.c.0.s8 %v522
        %v524 = vlaneseq
        %v525 = vshrl.u32 %v524, 7
        %v526 = vsub.s32 %v523, %v525
        %v527 = vrot.slane %v520, %v526
        %v529 = vunpack.c.l.s4 1983009808
        %v530 = vunpack.c.0.s8 %v529
        %v531 = vlaneseq
        %v532 = vshrl.u32 %v531, 7
        %v533 = vsub.s32 %v530, %v532
        %v534 = vrot.slane %v518, %v533
        %535 = vrot.lane.b32.xlu0 %v527, 127
        %v536 = vpop.permute.xlu0 %535
        %537 = vrot.lane.b32.xlu0 %v534, 127
        %v538 = vpop.permute.xlu0 %537
        %v539 = vrot.slane %v536, 4
        %v540 = vrot.slane %v538, 4
        %vm541 = vcmask 1043456
        %v542 = vsel %vm541, %v539, %v540
        %vm543 = vcmask 1039360
        %v544 = vsel %vm543, %v536, %v542
        %547 = vst [vmem:[#allocation4] sm:$0xcc] %v544
        %vm548 = vcmask 117762
        %549 = vst.msk [vmem:[#allocation4 + $0x8] sm:$0xc] %vm548, %v538
        %v550 = vld [vmem:[#allocation2] sm:$0x3f]
        %v552 = vcombine.high %v550, %v550
        %v554 = vunpack.c.l.s4 1983009808
        %v555 = vunpack.c.0.s8 %v554
        %v556 = vlaneseq
        %v557 = vshrl.u32 %v556, 7
        %v558 = vsub.s32 %v555, %v557
        %v559 = vrot.slane %v550, %v558
        %v561 = vunpack.c.l.s4 1983009808
        %v562 = vunpack.c.0.s8 %v561
        %v563 = vlaneseq
        %v564 = vshrl.u32 %v563, 7
        %v565 = vsub.s32 %v562, %v564
        %v566 = vrot.slane %v552, %v565
        %567 = vrot.lane.b32.xlu0 %v559, 126
        %v568 = vpop.permute.xlu0 %567
        %569 = vrot.lane.b32.xlu0 %v566, 126
        %v570 = vpop.permute.xlu0 %569
        %v571 = vrot.slane %v568, 4
        %v572 = vrot.slane %v570, 4
        %v573 = vsel %vm541, %v571, %v572
        %vm574 = vcmask 1031168
        %v575 = vsel %vm574, %v568, %v573
        %578 = vst [vmem:[#allocation4 + $0xc] sm:$0x33] %v575
        %579 = vst.msk [vmem:[#allocation4 + $0x14] sm:$0x3] %vm516, %v570
        %v580 = vld [vmem:[#allocation2] sm:$0x3f]
        %v582 = vcombine.low %v580, %v580
        %v584 = vunpack.c.l.s4 1983009808
        %v585 = vunpack.c.0.s8 %v584
        %v586 = vlaneseq
        %v587 = vshrl.u32 %v586, 7
        %v588 = vsub.s32 %v585, %v587
        %v589 = vrot.slane %v582, %v588
        %v591 = vunpack.c.l.s4 1983009808
        %v592 = vunpack.c.0.s8 %v591
        %v593 = vlaneseq
        %v594 = vshrl.u32 %v593, 7
        %v595 = vsub.s32 %v592, %v594
        %v596 = vrot.slane %v580, %v595
        %597 = vrot.lane.b32.xlu0 %v589, 111
        %v598 = vpop.permute.xlu0 %597
        %599 = vrot.lane.b32.xlu0 %v596, 111
        %v600 = vpop.permute.xlu0 %599
        %v601 = vrot.slane %v598, 4
        %v602 = vrot.slane %v600, 4
        %v603 = vsel %vm541, %v601, %v602
        %vm604 = vcmask 908288
        %v605 = vsel %vm604, %v598, %v603
        %608 = vst [vmem:[#allocation4 + $0xc] sm:$0xcc] %v605
        %609 = vst.msk [vmem:[#allocation4 + $0x14] sm:$0xc] %vm548, %v600
        %v610 = vld [vmem:[#allocation2] sm:$0x3f]
        %v612 = vcombine.high %v610, %v610
        %v614 = vunpack.c.l.s4 1983009808
        %v615 = vunpack.c.0.s8 %v614
        %v616 = vlaneseq
        %v617 = vshrl.u32 %v616, 7
        %v618 = vsub.s32 %v615, %v617
        %v619 = vrot.slane %v610, %v618
        %v621 = vunpack.c.l.s4 1983009808
        %v622 = vunpack.c.0.s8 %v621
        %v623 = vlaneseq
        %v624 = vshrl.u32 %v623, 7
        %v625 = vsub.s32 %v622, %v624
        %v626 = vrot.slane %v612, %v625
        %627 = vrot.lane.b32.xlu0 %v619, 110
        %v628 = vpop.permute.xlu0 %627
        %629 = vrot.lane.b32.xlu0 %v626, 110
        %v630 = vpop.permute.xlu0 %629
        %v631 = vrot.slane %v628, 4
        %v632 = vrot.slane %v630, 4
        %v633 = vsel %vm541, %v631, %v632
        %vm634 = vcmask 900096
        %v635 = vsel %vm634, %v628, %v633
        %638 = vst [vmem:[#allocation4 + $0x18] sm:$0x33] %v635
        %639 = vst.msk [vmem:[#allocation4 + $0x20] sm:$0x3] %vm516, %v630
        %v640 = vld [vmem:[#allocation2] sm:$0x3f]
        %v642 = vcombine.low %v640, %v640
        %v644 = vunpack.c.l.s4 1983009808
        %v645 = vunpack.c.0.s8 %v644
        %v646 = vlaneseq
        %v647 = vshrl.u32 %v646, 7
        %v648 = vsub.s32 %v645, %v647
        %v649 = vrot.slane %v642, %v648
        %v651 = vunpack.c.l.s4 1983009808
        %v652 = vunpack.c.0.s8 %v651
        %v653 = vlaneseq
        %v654 = vshrl.u32 %v653, 7
        %v655 = vsub.s32 %v652, %v654
        %v656 = vrot.slane %v640, %v655
        %657 = vrot.lane.b32.xlu0 %v649, 109
        %v658 = vpop.permute.xlu0 %657
        %659 = vrot.lane.b32.xlu0 %v656, 109
        %v660 = vpop.permute.xlu0 %659
        %v661 = vrot.slane %v658, 4
        %v662 = vrot.slane %v660, 4
        %v663 = vsel %vm541, %v661, %v662
        %vm664 = vcmask 891904
        %v665 = vsel %vm664, %v658, %v663
        %668 = vst [vmem:[#allocation4 + $0x18] sm:$0xcc] %v665
        %669 = vst.msk [vmem:[#allocation4 + $0x20] sm:$0xc] %vm548, %v660
        %v670 = vld [vmem:[#allocation2] sm:$0x3f]
        %v672 = vcombine.high %v670, %v670
        %v674 = vunpack.c.l.s4 1983009808
        %v675 = vunpack.c.0.s8 %v674
        %v676 = vlaneseq
        %v677 = vshrl.u32 %v676, 7
        %v678 = vsub.s32 %v675, %v677
        %v679 = vrot.slane %v670, %v678
        %v681 = vunpack.c.l.s4 1983009808
        %v682 = vunpack.c.0.s8 %v681
        %v683 = vlaneseq
        %v684 = vshrl.u32 %v683, 7
        %v685 = vsub.s32 %v682, %v684
        %v686 = vrot.slane %v672, %v685
        %687 = vrot.lane.b32.xlu0 %v679, 94
        %v688 = vpop.permute.xlu0 %687
        %689 = vrot.lane.b32.xlu0 %v686, 94
        %v690 = vpop.permute.xlu0 %689
        %v691 = vrot.slane %v688, 4
        %v692 = vrot.slane %v690, 4
        %v693 = vsel %vm541, %v691, %v692
        %vm694 = vcmask 769024
        %v695 = vsel %vm694, %v688, %v693
        %698 = vst [vmem:[#allocation4 + $0x24] sm:$0x33] %v695
        %699 = vst.msk [vmem:[#allocation4 + $0x2c] sm:$0x3] %vm516, %v690
        %v700 = vld [vmem:[#allocation2] sm:$0x3f]
        %v702 = vcombine.low %v700, %v700
        %v704 = vunpack.c.l.s4 1983009808
        %v705 = vunpack.c.0.s8 %v704
        %v706 = vlaneseq
        %v707 = vshrl.u32 %v706, 7
        %v708 = vsub.s32 %v705, %v707
        %v709 = vrot.slane %v702, %v708
        %v711 = vunpack.c.l.s4 1983009808
        %v712 = vunpack.c.0.s8 %v711
        %v713 = vlaneseq
        %v714 = vshrl.u32 %v713, 7
        %v715 = vsub.s32 %v712, %v714
        %v716 = vrot.slane %v700, %v715
        %717 = vrot.lane.b32.xlu0 %v709, 93
        %v718 = vpop.permute.xlu0 %717
        %719 = vrot.lane.b32.xlu0 %v716, 93
        %v720 = vpop.permute.xlu0 %719
        %v721 = vrot.slane %v718, 4
        %v722 = vrot.slane %v720, 4
        %v723 = vsel %vm541, %v721, %v722
        %vm724 = vcmask 760832
        %v725 = vsel %vm724, %v718, %v723
        %728 = vst [vmem:[#allocation4 + $0x24] sm:$0xcc] %v725
        %729 = vst.msk [vmem:[#allocation4 + $0x2c] sm:$0xc] %vm548, %v720
        %v730 = vld [vmem:[#allocation2] sm:$0x3f]
        %v732 = vcombine.high %v730, %v730
        %v734 = vunpack.c.l.s4 1983009808
        %v735 = vunpack.c.0.s8 %v734
        %v736 = vlaneseq
        %v737 = vshrl.u32 %v736, 7
        %v738 = vsub.s32 %v735, %v737
        %v739 = vrot.slane %v730, %v738
        %v741 = vunpack.c.l.s4 1983009808
        %v742 = vunpack.c.0.s8 %v741
        %v743 = vlaneseq
        %v744 = vshrl.u32 %v743, 7
        %v745 = vsub.s32 %v742, %v744
        %v746 = vrot.slane %v732, %v745
        %747 = vrot.lane.b32.xlu0 %v739, 92
        %v748 = vpop.permute.xlu0 %747
        %749 = vrot.lane.b32.xlu0 %v746, 92
        %v750 = vpop.permute.xlu0 %749
        %v751 = vrot.slane %v748, 4
        %v752 = vrot.slane %v750, 4
        %v753 = vsel %vm541, %v751, %v752
        %vm754 = vcmask 752640
        %v755 = vsel %vm754, %v748, %v753
        %758 = vst [vmem:[#allocation4 + $0x30] sm:$0x33] %v755
        %759 = vst.msk [vmem:[#allocation4 + $0x38] sm:$0x3] %vm516, %v750
        %v760 = vld [vmem:[#allocation4] sm:$0xff]
        %v761 = vld [vmem:[#allocation4 + $0x8] sm:$0xf]
        %v762 = vld [vmem:[#allocation4 + $0xc] sm:$0xff]
        %v763 = vld [vmem:[#allocation4 + $0x14] sm:$0xf]
        %v764 = vld [vmem:[#allocation4 + $0x18] sm:$0xff]
        %v765 = vld [vmem:[#allocation4 + $0x20] sm:$0xf]
        %v766 = vld [vmem:[#allocation4 + $0x24] sm:$0xff]
        %v767 = vld [vmem:[#allocation4 + $0x2c] sm:$0xf]
        %v768 = vld [vmem:[#allocation4 + $0x30] sm:$0x33]
        %v769 = vld [vmem:[#allocation4 + $0x38] sm:$0x3]
        %v780 = vunpack.c.l.b16 %v760
        %v781 = vunpack.c.h.b16 %v760
        %v782 = vunpack.c.l.b16 %v761
        %v783 = vunpack.c.l.b16 %v762
        %v784 = vunpack.c.h.b16 %v762
        %v785 = vunpack.c.l.b16 %v763
        %v786 = vunpack.c.l.b16 %v764
        %v787 = vunpack.c.h.b16 %v764
        %v788 = vunpack.c.l.b16 %v765
        %v789 = vunpack.c.l.b16 %v766
        %v790 = vunpack.c.h.b16 %v766
        %v791 = vunpack.c.l.b16 %v767
        %v792 = vunpack.c.l.b16 %v768
        %v793 = vunpack.c.h.b16 %v768
        %v794 = vunpack.c.l.b16 %v769
        %v795 = vpack.c.b16 %v783, %v780
        %v796 = vpack.c.b16 %v784, %v781
        %v797 = vpack.c.b16 %v785, %v782
        %v798 = vpack.c.b16 %v789, %v786
        %v799 = vpack.c.b16 %v790, %v787
        %v800 = vpack.c.b16 %v791, %v788
        %v801 = vpack.c.b16 %v792, %v792
        %v802 = vpack.c.b16 %v793, %v793
        %v803 = vpack.c.b16 %v794, %v794
        %vm810 = vcmask 293888
        %v812 = vsel %vm810, %v494, 0
        %vm814 = vcmask 1041408
        %v816 = vsel %vm814, %v801, 0
        %v819 = vsel %vm814, %v802, 0
        %v822 = vsel %vm814, %v803, 0
        %824 = vmatprep.subr.bf16.mxu0 %v796
        %825 = vmatpush1.bf16.msra.mxu0 %v795
        %826 = vmatprep.subr.bf16.mxu0 %v799
        %827 = vmatpush1.bf16.msra.mxu0 %v798
        %828 = vmatprep.subr.bf16.mxu0 %v819
        %829 = vmatpush1.bf16.msra.mxu0 %v816
        %830 = vmatprep.subr.bf16.mxu0 0
        %831 = vmatpush1.bf16.msra.mxu0 0
        %832 = vmatprep.subr.bf16.mxu0 0
        %833 = vmatpush1.bf16.msra.mxu0 0
        %834 = vmatprep.subr.bf16.mxu0 0
        %835 = vmatpush1.bf16.msra.mxu0 0
        %836 = vmatprep.subr.bf16.mxu0 0
        %837 = vmatpush1.bf16.msra.mxu0 0
        %838 = vmatprep.subr.bf16.mxu0 0
        %839 = vmatpush1.bf16.msra.mxu0 0
        %840 = vmatprep.subr.bf16.mxu0 0
        %841 = vmatpush1.bf16.msra.mxu0 0
        %842 = vmatprep.subr.bf16.mxu0 0
        %843 = vmatpush1.bf16.msra.mxu0 0
        %844 = vmatprep.subr.bf16.mxu0 0
        %845 = vmatpush1.bf16.msra.mxu0 0
        %846 = vmatprep.subr.bf16.mxu0 0
        %847 = vmatpush1.bf16.msra.mxu0 0
        %848 = vmatprep.subr.bf16.mxu0 0
        %849 = vmatpush1.bf16.msra.mxu0 0
        %850 = vmatprep.subr.bf16.mxu0 0
        %851 = vmatpush1.bf16.msra.mxu0 0
        %852 = vmatprep.subr.bf16.mxu0 0
        %853 = vmatpush1.bf16.msra.mxu0 0
        %854 = vmatprep.subr.bf16.mxu0 0
        %855 = vmatpush1.bf16.msra.mxu0 0
        %856 = vmatprep.mubr.bf16.mxu0 0
        %857 = vmatmul.mubr.bf16.gmra.mrb[0].mxu0 %v812
        %v858 = vpop.f32.mrb[0].mxu0
        %v859 = vadd.f32 0.0, %v858
        %v860 = vpop.f32.mrb[0].mxu0
        %v861 = vadd.f32 0.0, %v860
        %v862 = vpop.f32.mrb[0].mxu0
        %v863 = vpop.f32.mrb[0].mxu0
        %864 = vdwg.mxu0
        %865 = vmatprep.subr.bf16.mxu0 0
        %866 = vmatpush1.bf16.msra.mxu0 %v797
        %867 = vmatprep.subr.bf16.mxu0 0
        %868 = vmatpush1.bf16.msra.mxu0 %v800
        %869 = vmatprep.subr.bf16.mxu0 0
        %870 = vmatpush1.bf16.msra.mxu0 %v822
        %871 = vmatprep.subr.bf16.mxu0 0
        %872 = vmatpush1.bf16.msra.mxu0 0
        %873 = vmatprep.subr.bf16.mxu0 0
        %874 = vmatpush1.bf16.msra.mxu0 0
        %875 = vmatprep.subr.bf16.mxu0 0
        %876 = vmatpush1.bf16.msra.mxu0 0
        %877 = vmatprep.subr.bf16.mxu0 0
        %878 = vmatpush1.bf16.msra.mxu0 0
        %879 = vmatprep.subr.bf16.mxu0 0
        %880 = vmatpush1.bf16.msra.mxu0 0
        %881 = vmatprep.subr.bf16.mxu0 0
        %882 = vmatpush1.bf16.msra.mxu0 0
        %883 = vmatprep.subr.bf16.mxu0 0
        %884 = vmatpush1.bf16.msra.mxu0 0
        %885 = vmatprep.subr.bf16.mxu0 0
        %886 = vmatpush1.bf16.msra.mxu0 0
        %887 = vmatprep.subr.bf16.mxu0 0
        %888 = vmatpush1.bf16.msra.mxu0 0
        %889 = vmatprep.subr.bf16.mxu0 0
        %890 = vmatpush1.bf16.msra.mxu0 0
        %891 = vmatprep.subr.bf16.mxu0 0
        %892 = vmatpush1.bf16.msra.mxu0 0
        %893 = vmatprep.subr.bf16.mxu0 0
        %894 = vmatpush1.bf16.msra.mxu0 0
        %895 = vmatprep.subr.bf16.mxu0 0
        %896 = vmatpush1.bf16.msra.mxu0 0
        %897 = vmatprep.mubr.bf16.mxu0 0
        %898 = vmatmul.mubr.bf16.gmra.mrb[0].mxu0 %v812
        %v899 = vpop.f32.mrb[0].mxu0
        %v900 = vadd.f32 0.0, %v899
        %v901 = vpop.f32.mrb[0].mxu0
        %v902 = vpop.f32.mrb[0].mxu0
        %v903 = vpop.f32.mrb[0].mxu0
        %904 = vdwg.mxu0
        %v905 = vmax.f32 %v859, 0.0
        %v906 = vmax.f32 %v861, 0.0
        %v907 = vmax.f32 %v900, 0.0
        %v908 = vpack.c.bf16 %v905, %v905
        %v909 = vpack.c.bf16 %v906, %v906
        %v910 = vpack.c.bf16 %v907, %v907
        %911 = vst.msk [vmem:[#allocation3] sm:$0x3] %vm213, 0
        %912 = vst.msk [vmem:[#allocation3 + $0x4] sm:$0x3] %vm215, 0
        %v916 = vcombine.low %v908, %v909
        %v918 = vunpack.c.l.s4 1983009808
        %v919 = vunpack.c.0.s8 %v918
        %v920 = vlaneseq
        %v921 = vshrl.u32 %v920, 7
        %v922 = vsub.s32 %v919, %v921
        %v923 = vrot.slane %v916, %v922
        %v925 = vunpack.c.l.s4 1983009808
        %v926 = vunpack.c.0.s8 %v925
        %v927 = vlaneseq
        %v928 = vshrl.u32 %v927, 7
        %v929 = vsub.s32 %v926, %v928
        %v930 = vrot.slane %v910, %v929
        %v931 = vcombine.low %v923, %v930
        %932 = vrot.lane.b32.xlu0 %v931, 18
        %v933 = vpop.permute.xlu0 %932
        %v934 = vrot.slane %v933, 6
        %vm935 = vcmask 146432
        %v936 = vsel %vm935, %v934, %v933
        %vm938 = vcmask 1041552
        %vm939 = vcmask 1043458
        %vm940 = vmor %vm939, %vm938
        %vm941 = vcmask 267268
        %vm942 = vmor %vm941, %vm940
        %943 = vst.msk [vmem:[#allocation3] sm:$0x3f] %vm942, %v936
        %944 = vst.msk [vmem:[#allocation3] sm:$0x3] %vm232, 0
        %945 = vst.msk [vmem:[#allocation3] sm:$0x3] %vm249, 0
        %946 = vst.msk [vmem:[#allocation3] sm:$0x3] %vm266, 0
        %947 = vst.msk [vmem:[#allocation3] sm:$0x3] %vm283, 0
        %948 = vst.msk [vmem:[#allocation3] sm:$0x3] %vm300, 0
        %949 = vst.msk [vmem:[#allocation3] sm:$0x3] %vm317, 0
        %950 = vst.msk [vmem:[#allocation3 + $0x2] sm:$0x3] %vm339, 0
        %951 = vst.msk [vmem:[#allocation3 + $0x2] sm:$0x3] %vm356, 0
        %952 = vst.msk [vmem:[#allocation3 + $0x2] sm:$0x3] %vm373, 0
        %953 = vst.msk [vmem:[#allocation3 + $0x2] sm:$0x3] %vm390, 0
        %954 = vst.msk [vmem:[#allocation3 + $0x2] sm:$0x3] %vm407, 0
        %955 = vst.msk [vmem:[#allocation3 + $0x2] sm:$0x3] %vm424, 0
        %956 = vst.msk [vmem:[#allocation3 + $0x2] sm:$0x3] %vm441, 0
        %957 = vst.msk [vmem:[#allocation3 + $0x2] sm:$0x3] %vm458, 0
        %958 = vst.msk [vmem:[#allocation3 + $0x4] sm:$0x3] %vm475, 0
        %v959 = vld [vmem:[#allocation3] sm:$0x3f]
        %v961 = vcombine.high %v959, %v959
        %v963 = vunpack.c.l.s4 1983009808
        %v964 = vunpack.c.0.s8 %v963
        %v965 = vlaneseq
        %v966 = vshrl.u32 %v965, 7
        %v967 = vsub.s32 %v964, %v966
        %v968 = vrot.slane %v959, %v967
        %v970 = vunpack.c.l.s4 1983009808
        %v971 = vunpack.c.0.s8 %v970
        %v972 = vlaneseq
        %v973 = vshrl.u32 %v972, 7
        %v974 = vsub.s32 %v971, %v973
        %v975 = vrot.slane %v961, %v974
        %978 = vst [vmem:[#allocation4] sm:$0x33] %v968
        %979 = vst.msk [vmem:[#allocation4 + $0x8] sm:$0x3] %vm516, %v975
        %v980 = vld [vmem:[#allocation3] sm:$0x3f]
        %v982 = vcombine.low %v980, %v980
        %v984 = vunpack.c.l.s4 1983009808
        %v985 = vunpack.c.0.s8 %v984
        %v986 = vlaneseq
        %v987 = vshrl.u32 %v986, 7
        %v988 = vsub.s32 %v985, %v987
        %v989 = vrot.slane %v982, %v988
        %v991 = vunpack.c.l.s4 1983009808
        %v992 = vunpack.c.0.s8 %v991
        %v993 = vlaneseq
        %v994 = vshrl.u32 %v993, 7
        %v995 = vsub.s32 %v992, %v994
        %v996 = vrot.slane %v980, %v995
        %997 = vrot.lane.b32.xlu0 %v989, 127
        %v998 = vpop.permute.xlu0 %997
        %999 = vrot.lane.b32.xlu0 %v996, 127
        %v1000 = vpop.permute.xlu0 %999
        %v1001 = vrot.slane %v998, 4
        %v1002 = vrot.slane %v1000, 4
        %v1003 = vsel %vm541, %v1001, %v1002
        %v1004 = vsel %vm543, %v998, %v1003
        %1007 = vst [vmem:[#allocation4] sm:$0xcc] %v1004
        %1008 = vst.msk [vmem:[#allocation4 + $0x8] sm:$0xc] %vm548, %v1000
        %v1009 = vld [vmem:[#allocation3] sm:$0x3f]
        %v1011 = vcombine.high %v1009, %v1009
        %v1013 = vunpack.c.l.s4 1983009808
        %v1014 = vunpack.c.0.s8 %v1013
        %v1015 = vlaneseq
        %v1016 = vshrl.u32 %v1015, 7
        %v1017 = vsub.s32 %v1014, %v1016
        %v1018 = vrot.slane %v1009, %v1017
        %v1020 = vunpack.c.l.s4 1983009808
        %v1021 = vunpack.c.0.s8 %v1020
        %v1022 = vlaneseq
        %v1023 = vshrl.u32 %v1022, 7
        %v1024 = vsub.s32 %v1021, %v1023
        %v1025 = vrot.slane %v1011, %v1024
        %1026 = vrot.lane.b32.xlu0 %v1018, 126
        %v1027 = vpop.permute.xlu0 %1026
        %1028 = vrot.lane.b32.xlu0 %v1025, 126
        %v1029 = vpop.permute.xlu0 %1028
        %v1030 = vrot.slane %v1027, 4
        %v1031 = vrot.slane %v1029, 4
        %v1032 = vsel %vm541, %v1030, %v1031
        %v1033 = vsel %vm574, %v1027, %v1032
        %1036 = vst [vmem:[#allocation4 + $0xc] sm:$0x33] %v1033
        %1037 = vst.msk [vmem:[#allocation4 + $0x14] sm:$0x3] %vm516, %v1029
        %v1038 = vld [vmem:[#allocation3] sm:$0x3f]
        %v1040 = vcombine.low %v1038, %v1038
        %v1042 = vunpack.c.l.s4 1983009808
        %v1043 = vunpack.c.0.s8 %v1042
        %v1044 = vlaneseq
        %v1045 = vshrl.u32 %v1044, 7
        %v1046 = vsub.s32 %v1043, %v1045
        %v1047 = vrot.slane %v1040, %v1046
        %v1049 = vunpack.c.l.s4 1983009808
        %v1050 = vunpack.c.0.s8 %v1049
        %v1051 = vlaneseq
        %v1052 = vshrl.u32 %v1051, 7
        %v1053 = vsub.s32 %v1050, %v1052
        %v1054 = vrot.slane %v1038, %v1053
        %1055 = vrot.lane.b32.xlu0 %v1047, 111
        %v1056 = vpop.permute.xlu0 %1055
        %1057 = vrot.lane.b32.xlu0 %v1054, 111
        %v1058 = vpop.permute.xlu0 %1057
        %v1059 = vrot.slane %v1056, 4
        %v1060 = vrot.slane %v1058, 4
        %v1061 = vsel %vm541, %v1059, %v1060
        %v1062 = vsel %vm604, %v1056, %v1061
        %1065 = vst [vmem:[#allocation4 + $0xc] sm:$0xcc] %v1062
        %1066 = vst.msk [vmem:[#allocation4 + $0x14] sm:$0xc] %vm548, %v1058
        %v1067 = vld [vmem:[#allocation3] sm:$0x3f]
        %v1069 = vcombine.high %v1067, %v1067
        %v1071 = vunpack.c.l.s4 1983009808
        %v1072 = vunpack.c.0.s8 %v1071
        %v1073 = vlaneseq
        %v1074 = vshrl.u32 %v1073, 7
        %v1075 = vsub.s32 %v1072, %v1074
        %v1076 = vrot.slane %v1067, %v1075
        %v1078 = vunpack.c.l.s4 1983009808
        %v1079 = vunpack.c.0.s8 %v1078
        %v1080 = vlaneseq
        %v1081 = vshrl.u32 %v1080, 7
        %v1082 = vsub.s32 %v1079, %v1081
        %v1083 = vrot.slane %v1069, %v1082
        %1084 = vrot.lane.b32.xlu0 %v1076, 110
        %v1085 = vpop.permute.xlu0 %1084
        %1086 = vrot.lane.b32.xlu0 %v1083, 110
        %v1087 = vpop.permute.xlu0 %1086
        %v1088 = vrot.slane %v1085, 4
        %v1089 = vrot.slane %v1087, 4
        %v1090 = vsel %vm541, %v1088, %v1089
        %v1091 = vsel %vm634, %v1085, %v1090
        %1094 = vst [vmem:[#allocation4 + $0x18] sm:$0x33] %v1091
        %1095 = vst.msk [vmem:[#allocation4 + $0x20] sm:$0x3] %vm516, %v1087
        %v1096 = vld [vmem:[#allocation3] sm:$0x3f]
        %v1098 = vcombine.low %v1096, %v1096
        %v1100 = vunpack.c.l.s4 1983009808
        %v1101 = vunpack.c.0.s8 %v1100
        %v1102 = vlaneseq
        %v1103 = vshrl.u32 %v1102, 7
        %v1104 = vsub.s32 %v1101, %v1103
        %v1105 = vrot.slane %v1098, %v1104
        %v1107 = vunpack.c.l.s4 1983009808
        %v1108 = vunpack.c.0.s8 %v1107
        %v1109 = vlaneseq
        %v1110 = vshrl.u32 %v1109, 7
        %v1111 = vsub.s32 %v1108, %v1110
        %v1112 = vrot.slane %v1096, %v1111
        %1113 = vrot.lane.b32.xlu0 %v1105, 109
        %v1114 = vpop.permute.xlu0 %1113
        %1115 = vrot.lane.b32.xlu0 %v1112, 109
        %v1116 = vpop.permute.xlu0 %1115
        %v1117 = vrot.slane %v1114, 4
        %v1118 = vrot.slane %v1116, 4
        %v1119 = vsel %vm541, %v1117, %v1118
        %v1120 = vsel %vm664, %v1114, %v1119
        %1123 = vst [vmem:[#allocation4 + $0x18] sm:$0xcc] %v1120
        %1124 = vst.msk [vmem:[#allocation4 + $0x20] sm:$0xc] %vm548, %v1116
        %v1125 = vld [vmem:[#allocation3] sm:$0x3f]
        %v1127 = vcombine.high %v1125, %v1125
        %v1129 = vunpack.c.l.s4 1983009808
        %v1130 = vunpack.c.0.s8 %v1129
        %v1131 = vlaneseq
        %v1132 = vshrl.u32 %v1131, 7
        %v1133 = vsub.s32 %v1130, %v1132
        %v1134 = vrot.slane %v1125, %v1133
        %v1136 = vunpack.c.l.s4 1983009808
        %v1137 = vunpack.c.0.s8 %v1136
        %v1138 = vlaneseq
        %v1139 = vshrl.u32 %v1138, 7
        %v1140 = vsub.s32 %v1137, %v1139
        %v1141 = vrot.slane %v1127, %v1140
        %1142 = vrot.lane.b32.xlu0 %v1134, 94
        %v1143 = vpop.permute.xlu0 %1142
        %1144 = vrot.lane.b32.xlu0 %v1141, 94
        %v1145 = vpop.permute.xlu0 %1144
        %v1146 = vrot.slane %v1143, 4
        %v1147 = vrot.slane %v1145, 4
        %v1148 = vsel %vm541, %v1146, %v1147
        %v1149 = vsel %vm694, %v1143, %v1148
        %1152 = vst [vmem:[#allocation4 + $0x24] sm:$0x33] %v1149
        %1153 = vst.msk [vmem:[#allocation4 + $0x2c] sm:$0x3] %vm516, %v1145
        %v1154 = vld [vmem:[#allocation3] sm:$0x3f]
        %v1156 = vcombine.low %v1154, %v1154
        %v1158 = vunpack.c.l.s4 1983009808
        %v1159 = vunpack.c.0.s8 %v1158
        %v1160 = vlaneseq
        %v1161 = vshrl.u32 %v1160, 7
        %v1162 = vsub.s32 %v1159, %v1161
        %v1163 = vrot.slane %v1156, %v1162
        %v1165 = vunpack.c.l.s4 1983009808
        %v1166 = vunpack.c.0.s8 %v1165
        %v1167 = vlaneseq
        %v1168 = vshrl.u32 %v1167, 7
        %v1169 = vsub.s32 %v1166, %v1168
        %v1170 = vrot.slane %v1154, %v1169
        %1171 = vrot.lane.b32.xlu0 %v1163, 93
        %v1172 = vpop.permute.xlu0 %1171
        %1173 = vrot.lane.b32.xlu0 %v1170, 93
        %v1174 = vpop.permute.xlu0 %1173
        %v1175 = vrot.slane %v1172, 4
        %v1176 = vrot.slane %v1174, 4
        %v1177 = vsel %vm541, %v1175, %v1176
        %v1178 = vsel %vm724, %v1172, %v1177
        %1181 = vst [vmem:[#allocation4 + $0x24] sm:$0xcc] %v1178
        %1182 = vst.msk [vmem:[#allocation4 + $0x2c] sm:$0xc] %vm548, %v1174
        %v1183 = vld [vmem:[#allocation3] sm:$0x3f]
        %v1185 = vcombine.high %v1183, %v1183
        %v1187 = vunpack.c.l.s4 1983009808
        %v1188 = vunpack.c.0.s8 %v1187
        %v1189 = vlaneseq
        %v1190 = vshrl.u32 %v1189, 7
        %v1191 = vsub.s32 %v1188, %v1190
        %v1192 = vrot.slane %v1183, %v1191
        %v1194 = vunpack.c.l.s4 1983009808
        %v1195 = vunpack.c.0.s8 %v1194
        %v1196 = vlaneseq
        %v1197 = vshrl.u32 %v1196, 7
        %v1198 = vsub.s32 %v1195, %v1197
        %v1199 = vrot.slane %v1185, %v1198
        %1200 = vrot.lane.b32.xlu0 %v1192, 92
        %v1201 = vpop.permute.xlu0 %1200
        %1202 = vrot.lane.b32.xlu0 %v1199, 92
        %v1203 = vpop.permute.xlu0 %1202
        %v1204 = vrot.slane %v1201, 4
        %v1205 = vrot.slane %v1203, 4
        %v1206 = vsel %vm541, %v1204, %v1205
        %v1207 = vsel %vm754, %v1201, %v1206
        %1210 = vst [vmem:[#allocation4 + $0x30] sm:$0x33] %v1207
        %1211 = vst.msk [vmem:[#allocation4 + $0x38] sm:$0x3] %vm516, %v1203
        %v1212 = vld [vmem:[#allocation4] sm:$0xff]
        %v1213 = vld [vmem:[#allocation4 + $0x8] sm:$0xf]
        %v1214 = vld [vmem:[#allocation4 + $0xc] sm:$0xff]
        %v1215 = vld [vmem:[#allocation4 + $0x14] sm:$0xf]
        %v1216 = vld [vmem:[#allocation4 + $0x18] sm:$0xff]
        %v1217 = vld [vmem:[#allocation4 + $0x20] sm:$0xf]
        %v1218 = vld [vmem:[#allocation4 + $0x24] sm:$0xff]
        %v1219 = vld [vmem:[#allocation4 + $0x2c] sm:$0xf]
        %v1220 = vld [vmem:[#allocation4 + $0x30] sm:$0x33]
        %v1221 = vld [vmem:[#allocation4 + $0x38] sm:$0x3]
        %v1232 = vunpack.c.l.b16 %v1212
        %v1233 = vunpack.c.h.b16 %v1212
        %v1234 = vunpack.c.l.b16 %v1213
        %v1235 = vunpack.c.l.b16 %v1214
        %v1236 = vunpack.c.h.b16 %v1214
        %v1237 = vunpack.c.l.b16 %v1215
        %v1238 = vunpack.c.l.b16 %v1216
        %v1239 = vunpack.c.h.b16 %v1216
        %v1240 = vunpack.c.l.b16 %v1217
        %v1241 = vunpack.c.l.b16 %v1218
        %v1242 = vunpack.c.h.b16 %v1218
        %v1243 = vunpack.c.l.b16 %v1219
        %v1244 = vunpack.c.l.b16 %v1220
        %v1245 = vunpack.c.h.b16 %v1220
        %v1246 = vunpack.c.l.b16 %v1221
        %v1247 = vpack.c.b16 %v1235, %v1232
        %v1248 = vpack.c.b16 %v1236, %v1233
        %v1249 = vpack.c.b16 %v1237, %v1234
        %v1250 = vpack.c.b16 %v1241, %v1238
        %v1251 = vpack.c.b16 %v1242, %v1239
        %v1252 = vpack.c.b16 %v1243, %v1240
        %v1253 = vpack.c.b16 %v1244, %v1244
        %v1254 = vpack.c.b16 %v1245, %v1245
        %v1255 = vpack.c.b16 %v1246, %v1246
        %v1263 = vsel %vm810, %v495, 0
        %v1266 = vsel %vm814, %v1253, 0
        %v1269 = vsel %vm814, %v1254, 0
        %v1272 = vsel %vm814, %v1255, 0
        %1274 = vmatprep.subr.bf16.mxu0 %v1248
        %1275 = vmatpush1.bf16.msra.mxu0 %v1247
        %1276 = vmatprep.subr.bf16.mxu0 %v1251
        %1277 = vmatpush1.bf16.msra.mxu0 %v1250
        %1278 = vmatprep.subr.bf16.mxu0 %v1269
        %1279 = vmatpush1.bf16.msra.mxu0 %v1266
        %1280 = vmatprep.subr.bf16.mxu0 0
        %1281 = vmatpush1.bf16.msra.mxu0 0
        %1282 = vmatprep.subr.bf16.mxu0 0
        %1283 = vmatpush1.bf16.msra.mxu0 0
        %1284 = vmatprep.subr.bf16.mxu0 0
        %1285 = vmatpush1.bf16.msra.mxu0 0
        %1286 = vmatprep.subr.bf16.mxu0 0
        %1287 = vmatpush1.bf16.msra.mxu0 0
        %1288 = vmatprep.subr.bf16.mxu0 0
        %1289 = vmatpush1.bf16.msra.mxu0 0
        %1290 = vmatprep.subr.bf16.mxu0 0
        %1291 = vmatpush1.bf16.msra.mxu0 0
        %1292 = vmatprep.subr.bf16.mxu0 0
        %1293 = vmatpush1.bf16.msra.mxu0 0
        %1294 = vmatprep.subr.bf16.mxu0 0
        %1295 = vmatpush1.bf16.msra.mxu0 0
        %1296 = vmatprep.subr.bf16.mxu0 0
        %1297 = vmatpush1.bf16.msra.mxu0 0
        %1298 = vmatprep.subr.bf16.mxu0 0
        %1299 = vmatpush1.bf16.msra.mxu0 0
        %1300 = vmatprep.subr.bf16.mxu0 0
        %1301 = vmatpush1.bf16.msra.mxu0 0
        %1302 = vmatprep.subr.bf16.mxu0 0
        %1303 = vmatpush1.bf16.msra.mxu0 0
        %1304 = vmatprep.subr.bf16.mxu0 0
        %1305 = vmatpush1.bf16.msra.mxu0 0
        %1306 = vmatprep.mubr.bf16.mxu0 0
        %1307 = vmatmul.mubr.bf16.gmra.mrb[0].mxu0 %v1263
        %v1308 = vpop.f32.mrb[0].mxu0
        %v1309 = vadd.f32 0.0, %v1308
        %v1310 = vpop.f32.mrb[0].mxu0
        %v1311 = vadd.f32 0.0, %v1310
        %v1312 = vpop.f32.mrb[0].mxu0
        %v1313 = vpop.f32.mrb[0].mxu0
        %1314 = vdwg.mxu0
        %1315 = vmatprep.subr.bf16.mxu0 0
        %1316 = vmatpush1.bf16.msra.mxu0 %v1249
        %1317 = vmatprep.subr.bf16.mxu0 0
        %1318 = vmatpush1.bf16.msra.mxu0 %v1252
        %1319 = vmatprep.subr.bf16.mxu0 0
        %1320 = vmatpush1.bf16.msra.mxu0 %v1272
        %1321 = vmatprep.subr.bf16.mxu0 0
        %1322 = vmatpush1.bf16.msra.mxu0 0
        %1323 = vmatprep.subr.bf16.mxu0 0
        %1324 = vmatpush1.bf16.msra.mxu0 0
        %1325 = vmatprep.subr.bf16.mxu0 0
        %1326 = vmatpush1.bf16.msra.mxu0 0
        %1327 = vmatprep.subr.bf16.mxu0 0
        %1328 = vmatpush1.bf16.msra.mxu0 0
        %1329 = vmatprep.subr.bf16.mxu0 0
        %1330 = vmatpush1.bf16.msra.mxu0 0
        %1331 = vmatprep.subr.bf16.mxu0 0
        %1332 = vmatpush1.bf16.msra.mxu0 0
        %1333 = vmatprep.subr.bf16.mxu0 0
        %1334 = vmatpush1.bf16.msra.mxu0 0
        %1335 = vmatprep.subr.bf16.mxu0 0
        %1336 = vmatpush1.bf16.msra.mxu0 0
        %1337 = vmatprep.subr.bf16.mxu0 0
        %1338 = vmatpush1.bf16.msra.mxu0 0
        %1339 = vmatprep.subr.bf16.mxu0 0
        %1340 = vmatpush1.bf16.msra.mxu0 0
        %1341 = vmatprep.subr.bf16.mxu0 0
        %1342 = vmatpush1.bf16.msra.mxu0 0
        %1343 = vmatprep.subr.bf16.mxu0 0
        %1344 = vmatpush1.bf16.msra.mxu0 0
        %1345 = vmatprep.subr.bf16.mxu0 0
        %1346 = vmatpush1.bf16.msra.mxu0 0
        %1347 = vmatprep.mubr.bf16.mxu0 0
        %1348 = vmatmul.mubr.bf16.gmra.mrb[0].mxu0 %v1263
        %v1349 = vpop.f32.mrb[0].mxu0
        %v1350 = vadd.f32 0.0, %v1349
        %v1351 = vpop.f32.mrb[0].mxu0
        %v1352 = vpop.f32.mrb[0].mxu0
        %v1353 = vpop.f32.mrb[0].mxu0
        %1354 = vdwg.mxu0
        %v1355 = vld [vmem:[%s181] sm:$0xf]
        %v1356 = vadd.f32 %v1309, %v1355
        %v1357 = vmax.f32 %v1356, 0.0
        %vm1358 = vcmask 125952
        %1359 = vst.msk [vmem:[%s211] sm:$0xf] %vm1358, %v1357
        %v1360 = vld [vmem:[%s181] sm:$0xf]
        %1362 = vrot.lane.b32.xlu0 %v1360, 1
        %v1363 = vpop.permute.xlu0 %1362
        %v1365 = vadd.f32 %v1309, %v1363
        %v1366 = vmax.f32 %v1365, 0.0
        %1368 = vrot.lane.b32.xlu0 %v1366, 127
        %v1369 = vpop.permute.xlu0 %1368
        %vm1371 = vcmask 257152
        %1372 = vst.msk [vmem:[%s211] sm:$0xf] %vm1371, %v1369
        %v1373 = vld [vmem:[%s181] sm:$0xf]
        %1375 = vrot.lane.b32.xlu0 %v1373, 2
        %v1376 = vpop.permute.xlu0 %1375
        %v1378 = vadd.f32 %v1309, %v1376
        %v1379 = vmax.f32 %v1378, 0.0
        %1381 = vrot.lane.b32.xlu0 %v1379, 126
        %v1382 = vpop.permute.xlu0 %1381
        %vm1384 = vcmask 388352
        %1385 = vst.msk [vmem:[%s211] sm:$0xf] %vm1384, %v1382
        %v1386 = vld [vmem:[%s181] sm:$0xf]
        %1388 = vrot.lane.b32.xlu0 %v1386, 3
        %v1389 = vpop.permute.xlu0 %1388
        %v1391 = vadd.f32 %v1309, %v1389
        %v1392 = vmax.f32 %v1391, 0.0
        %1394 = vrot.lane.b32.xlu0 %v1392, 125
        %v1395 = vpop.permute.xlu0 %1394
        %vm1397 = vcmask 519552
        %1398 = vst.msk [vmem:[%s211] sm:$0xf] %vm1397, %v1395
        %v1399 = vld [vmem:[%s181] sm:$0xf]
        %1401 = vrot.lane.b32.xlu0 %v1399, 4
        %v1402 = vpop.permute.xlu0 %1401
        %v1404 = vadd.f32 %v1309, %v1402
        %v1405 = vmax.f32 %v1404, 0.0
        %1407 = vrot.lane.b32.xlu0 %v1405, 124
        %v1408 = vpop.permute.xlu0 %1407
        %vm1410 = vcmask 650752
        %1411 = vst.msk [vmem:[%s211] sm:$0xf] %vm1410, %v1408
        %v1412 = vld [vmem:[%s181] sm:$0xf]
        %1414 = vrot.lane.b32.xlu0 %v1412, 5
        %v1415 = vpop.permute.xlu0 %1414
        %v1417 = vadd.f32 %v1309, %v1415
        %v1418 = vmax.f32 %v1417, 0.0
        %1420 = vrot.lane.b32.xlu0 %v1418, 123
        %v1421 = vpop.permute.xlu0 %1420
        %vm1423 = vcmask 781952
        %1424 = vst.msk [vmem:[%s211] sm:$0xf] %vm1423, %v1421
        %v1425 = vld [vmem:[%s181] sm:$0xf]
        %1427 = vrot.lane.b32.xlu0 %v1425, 6
        %v1428 = vpop.permute.xlu0 %1427
        %v1430 = vadd.f32 %v1309, %v1428
        %v1431 = vmax.f32 %v1430, 0.0
        %1433 = vrot.lane.b32.xlu0 %v1431, 122
        %v1434 = vpop.permute.xlu0 %1433
        %vm1436 = vcmask 913152
        %1437 = vst.msk [vmem:[%s211] sm:$0xf] %vm1436, %v1434
        %v1438 = vld [vmem:[%s181] sm:$0xf]
        %1440 = vrot.lane.b32.xlu0 %v1438, 7
        %v1441 = vpop.permute.xlu0 %1440
        %v1443 = vadd.f32 %v1309, %v1441
        %v1444 = vadd.f32 %v1311, %v1441
        %v1445 = vmax.f32 %v1443, 0.0
        %v1446 = vmax.f32 %v1444, 0.0
        %v1449 = vcombine.low %v1445, %v1446
        %1450 = vrot.lane.b32.xlu0 %v1449, 121
        %v1451 = vpop.permute.xlu0 %1450
        %v1452 = vrot.slane %v1451, 4
        %vm1453 = vcmask 990208
        %v1454 = vsel %vm1453, %v1451, %v1452
        %vm1456 = vcmask 1044352
        %1457 = vst.msk [vmem:[%s211] sm:$0xf] %vm1456, %v1454
        %v1458 = vld [vmem:[%s181 + $0x4] sm:$0xf]
        %1460 = vrot.lane.b32.xlu0 %v1458, 8
        %v1461 = vpop.permute.xlu0 %1460
        %v1463 = vadd.f32 %v1311, %v1461
        %v1464 = vmax.f32 %v1463, 0.0
        %1466 = vrot.lane.b32.xlu0 %v1464, 120
        %v1467 = vpop.permute.xlu0 %1466
        %1469 = vst.msk [vmem:[%s211 + $0x4] sm:$0xf] %vm1358, %v1467
        %v1470 = vld [vmem:[%s181 + $0x4] sm:$0xf]
        %1472 = vrot.lane.b32.xlu0 %v1470, 9
        %v1473 = vpop.permute.xlu0 %1472
        %v1475 = vadd.f32 %v1311, %v1473
        %v1476 = vmax.f32 %v1475, 0.0
        %1478 = vrot.lane.b32.xlu0 %v1476, 119
        %v1479 = vpop.permute.xlu0 %1478
        %1481 = vst.msk [vmem:[%s211 + $0x4] sm:$0xf] %vm1371, %v1479
        %v1482 = vld [vmem:[%s181 + $0x4] sm:$0xf]
        %1484 = vrot.lane.b32.xlu0 %v1482, 10
        %v1485 = vpop.permute.xlu0 %1484
        %v1487 = vadd.f32 %v1311, %v1485
        %v1488 = vmax.f32 %v1487, 0.0
        %1490 = vrot.lane.b32.xlu0 %v1488, 118
        %v1491 = vpop.permute.xlu0 %1490
        %1493 = vst.msk [vmem:[%s211 + $0x4] sm:$0xf] %vm1384, %v1491
        %v1494 = vld [vmem:[%s181 + $0x4] sm:$0xf]
        %1496 = vrot.lane.b32.xlu0 %v1494, 11
        %v1497 = vpop.permute.xlu0 %1496
        %v1499 = vadd.f32 %v1311, %v1497
        %v1500 = vmax.f32 %v1499, 0.0
        %1502 = vrot.lane.b32.xlu0 %v1500, 117
        %v1503 = vpop.permute.xlu0 %1502
        %1505 = vst.msk [vmem:[%s211 + $0x4] sm:$0xf] %vm1397, %v1503
        %v1506 = vld [vmem:[%s181 + $0x4] sm:$0xf]
        %1508 = vrot.lane.b32.xlu0 %v1506, 12
        %v1509 = vpop.permute.xlu0 %1508
        %v1511 = vadd.f32 %v1311, %v1509
        %v1512 = vmax.f32 %v1511, 0.0
        %1514 = vrot.lane.b32.xlu0 %v1512, 116
        %v1515 = vpop.permute.xlu0 %1514
        %1517 = vst.msk [vmem:[%s211 + $0x4] sm:$0xf] %vm1410, %v1515
        %v1518 = vld [vmem:[%s181 + $0x4] sm:$0xf]
        %1520 = vrot.lane.b32.xlu0 %v1518, 13
        %v1521 = vpop.permute.xlu0 %1520
        %v1523 = vadd.f32 %v1311, %v1521
        %v1524 = vmax.f32 %v1523, 0.0
        %1526 = vrot.lane.b32.xlu0 %v1524, 115
        %v1527 = vpop.permute.xlu0 %1526
        %1529 = vst.msk [vmem:[%s211 + $0x4] sm:$0xf] %vm1423, %v1527
        %v1530 = vld [vmem:[%s181 + $0x4] sm:$0xf]
        %1532 = vrot.lane.b32.xlu0 %v1530, 14
        %v1533 = vpop.permute.xlu0 %1532
        %v1535 = vadd.f32 %v1311, %v1533
        %v1536 = vmax.f32 %v1535, 0.0
        %1538 = vrot.lane.b32.xlu0 %v1536, 114
        %v1539 = vpop.permute.xlu0 %1538
        %1541 = vst.msk [vmem:[%s211 + $0x4] sm:$0xf] %vm1436, %v1539
        %v1542 = vld [vmem:[%s181 + $0x4] sm:$0xf]
        %1544 = vrot.lane.b32.xlu0 %v1542, 15
        %v1545 = vpop.permute.xlu0 %1544
        %v1547 = vadd.f32 %v1311, %v1545
        %v1548 = vadd.f32 %v1350, %v1545
        %v1549 = vmax.f32 %v1547, 0.0
        %v1550 = vmax.f32 %v1548, 0.0
        %v1553 = vcombine.low %v1549, %v1550
        %1554 = vrot.lane.b32.xlu0 %v1553, 113
        %v1555 = vpop.permute.xlu0 %1554
        %v1556 = vrot.slane %v1555, 4
        %vm1557 = vcmask 924672
        %v1558 = vsel %vm1557, %v1555, %v1556
        %1560 = vst.msk [vmem:[%s211 + $0x4] sm:$0xf] %vm1456, %v1558
        %s1561 = sand.u32 %s97, 1
        %s1562 = scalar_lea.sflag [#allocation7], %s1561
        %s1563 = sand.u32 %s97, 1
        %s1564 = smul.addr %s1563, 8
        %s1565 = scalar_lea.vmem [#allocation11], %s1564
        // Predicated region
        $region45: #{tpu_custom_call.1} parent=31 // pred_check
          %p1566 = pneg %p107
        $region46: #{tpu_custom_call.1} parent=31 // pred_check_branch
          %1568 = sbr.rel (%p1566) target = $region48
        $region47: #{tpu_custom_call.1} parent=31 // pred_region
          %s1570 = ssub.s32 128, 128
          %1571 = vsyncadd %s1562, %s1570
          %s1572 = smul.addr %s21, 2
          %s1573 = smul.addr %s1572, 64
          %s1574 = scalar_lea.hbm %s3, %s1573
          %s1576 = sshll.u32 %s1565, 4
          %s1577 = int_to_ptr.vmem [resolvable:$true] %s1576
          %1579 = dma.vmem_to_hbm [thread:$0]  %s1577, 128, %s1574, %s1562
        $region48: #{tpu_custom_call.1} parent=31 // pred_fallthru
          _
      $region32: #{tpu_custom_call.1} parent=5 // pred_fallthru
        _
      %p1580 = scmp.le.s32.totalorder 2, %s16
      // Predicated region
      $region49: #{tpu_custom_call.1} parent=5 // pred_check
        %p1581 = pneg %p1580
      $region50: #{tpu_custom_call.1} parent=5 // pred_check_branch
        %1583 = sbr.rel (%p1581) target = $region52
      $region51: #{tpu_custom_call.1} parent=5 // pred_region
        %s1584 = ssub.s32 %s16, 2
        // Predicated region
        $region53: #{tpu_custom_call.1} parent=51 // pred_check
          %p1585 = pneg %p113
        $region54: #{tpu_custom_call.1} parent=51 // pred_check_branch
          %1587 = sbr.rel (%p1585) target = $region56
        $region55: #{tpu_custom_call.1} parent=51 // pred_region
          %s1588 = sand.u32 %s98, 1
          %s1589 = scalar_lea.sflag [#allocation7], %s1588
          %s1590 = sand.u32 %s98, 1
          %s1591 = smul.addr %s1590, 8
          %s1592 = scalar_lea.vmem [#allocation11], %s1591
          %1593 = dma.done %s1589, 128
        $region56: #{tpu_custom_call.1} parent=51 // pred_fallthru
          _
      $region52: #{tpu_custom_call.1} parent=5 // pred_fallthru
        _
    $region6: #{tpu_custom_call.1} parent=1 // loop_footer
      %s20 = sadd.s32 1, %s16
    $region7: #{tpu_custom_call.1} parent=1 // loop_footer_branch
      %15 = sbr.rel target = $region3
    $region8: #{tpu_custom_call.1} parent=1 // loop_exit
      _
    %1594 = vsyncpa [#allocation6], 1
    %s1595 = scalar_lea.sflag [#allocation6], 1
    %1596 = vsyncpa %s1595, 1
    %1597 = vsyncpa [#allocation9], 1
    %1598 = vsyncpa [#allocation7], 1
    %s1599 = scalar_lea.sflag [#allocation7], 1
    %1600 = vsyncpa %s1599, 1

</llo_original>
